<compile_context>
chip_gen: v5e
topology: v5e:2x2
jax: 0.10.0
libtpu: 0.0.40
codegen_flags: <defaults>
</compile_context>

<pallas_src>
import math

import jax
import jax.numpy as jnp
from jax.experimental import pallas as pl
from jax.experimental.pallas import tpu as pltpu

HIDDEN = 500
HIDDEN_PAD = 512          # 4 * 128 lanes
OUT_DIM = 784             # 1 * 28 * 28
OUT_PAD = 896             # 7 * 128 lanes -> lane-dense, unmasked output stores
MAX_TB = 256              # batch tile size


def _round_up(x, m):
    return (x + m - 1) // m * m


def _decoder_kernel(z_ref, w1_ref, b1_ref, w2_ref, b2_ref, w3_ref, b3_ref, o_ref):
    # Fused MLP hot path: bf16 MXU matmuls with f32 accumulation; bias add and
    # tanh (EUP) in f32; cast back to bf16 only right before the next dot.
    z = z_ref[...]                                                  # bf16 (TB, in_dim)
    h1 = jnp.dot(z, w1_ref[...], preferred_element_type=jnp.float32) + b1_ref[...]
    h1 = jnp.tanh(h1)
    h2 = jnp.dot(h1.astype(jnp.bfloat16), w2_ref[...],
                 preferred_element_type=jnp.float32) + b2_ref[...]
    h2 = jnp.tanh(h2)
    out = jnp.dot(h2.astype(jnp.bfloat16), w3_ref[...],
                  preferred_element_type=jnp.float32) + b3_ref[...]
    o_ref[...] = out.astype(o_ref.dtype)


def prepare_params(params):
    """Zero-pad hidden 500->512 / output 784->896 and cast weights to bf16.

    Padding is exact: padded weight rows/cols and bias lanes are zero, so
    padded hidden units are tanh(0) = 0 and padded output lanes (sliced off in
    the wrapper) never affect the real 784 outputs.
    """
    w1, b1, w2, b2, w3, b3 = params
    in_dim = w1.shape[0]
    w1p = jnp.zeros((in_dim, HIDDEN_PAD), jnp.float32).at[:, :HIDDEN].set(w1)
    b1p = jnp.zeros((1, HIDDEN_PAD), jnp.float32).at[:, :HIDDEN].set(b1)
    w2p = jnp.zeros((HIDDEN_PAD, HIDDEN_PAD), jnp.float32).at[:HIDDEN, :HIDDEN].set(w2)
    b2p = jnp.zeros((1, HIDDEN_PAD), jnp.float32).at[:, :HIDDEN].set(b2)
    w3p = jnp.zeros((HIDDEN_PAD, OUT_PAD), jnp.float32).at[:HIDDEN, :OUT_DIM].set(w3)
    b3p = jnp.zeros((1, OUT_PAD), jnp.float32).at[:, :OUT_DIM].set(b3)
    return (w1p.astype(jnp.bfloat16), b1p,
            w2p.astype(jnp.bfloat16), b2p,
            w3p.astype(jnp.bfloat16), b3p)


def mnist_decoder_forward(z, prepared_params):
    """z: (B, ...) latent; prepared_params from prepare_params().
    Returns mu_img of shape (B, 1, 28, 28) in float32."""
    w1, b1, w2, b2, w3, b3 = prepared_params
    B = z.shape[0]
    h = z.reshape(B, -1).astype(jnp.float32)      # glue: view(z.size(0), -1)
    in_dim = h.shape[1]

    # Batch tiling: TB is a multiple of 8; pad B up to a multiple of TB so the
    # grid divides evenly (padded rows are garbage, sliced off below).
    tb = min(MAX_TB, _round_up(B, 8))
    b_pad = _round_up(B, tb)
    if b_pad != B:
        h = jnp.pad(h, ((0, b_pad - B), (0, 0)))
    h = h.astype(jnp.bfloat16)

    grid = (b_pad // tb,)

    # VMEM budget from actual footprint (double-buffered operands + in-kernel
    # intermediates) rather than the full 64 MiB of v7x.
    vmem_bytes = 2 * (w1.size + w2.size + w3.size) * 2         # bf16 weights x2 buf
    vmem_bytes += 2 * (b1.size + b2.size + b3.size) * 4        # f32 biases x2 buf
    vmem_bytes += 2 * (tb * in_dim * 2 + tb * OUT_PAD * 4)     # z / out tiles x2 buf
    vmem_bytes += 4 * tb * HIDDEN_PAD * 4                      # h1/h2 f32 intermediates
    vmem_bytes = min(max(vmem_bytes + (4 << 20), 16 << 20), 32 << 20)

    out = pl.pallas_call(
        _decoder_kernel,
        out_shape=jax.ShapeDtypeStruct((b_pad, OUT_PAD), jnp.float32),
        grid=grid,
        in_specs=[
            pl.BlockSpec((tb, in_dim), lambda i: (i, 0)),       # z tiles over batch
            # Weights/biases: constant block index -> VMEM-resident, DMA'd once.
            pl.BlockSpec(w1.shape, lambda i: (0, 0)),
            pl.BlockSpec(b1.shape, lambda i: (0, 0)),
            pl.BlockSpec(w2.shape, lambda i: (0, 0)),
            pl.BlockSpec(b2.shape, lambda i: (0, 0)),
            pl.BlockSpec(w3.shape, lambda i: (0, 0)),
            pl.BlockSpec(b3.shape, lambda i: (0, 0)),
        ],
        out_specs=pl.BlockSpec((tb, OUT_PAD), lambda i: (i, 0)),
        compiler_params=pltpu.CompilerParams(
            dimension_semantics=("parallel",),       # shard batch tiles across TCs (v7x)
            vmem_limit_bytes=vmem_bytes,
        ),
    )(h, w1, b1, w2, b2, w3, b3)

    return out[:B, :OUT_DIM].reshape(B, 1, 28, 28)


def init_params(key, input_dim):
    """Deterministic init mirroring nn.Linear's U(-1/sqrt(fan_in), 1/sqrt(fan_in))."""

    def linear(key, fan_in, fan_out):
        kw, kb = jax.random.split(key)
        bound = 1.0 / math.sqrt(fan_in)
        w = jax.random.uniform(
            kw, (fan_in, fan_out), jnp.float32, minval=-bound, maxval=bound
        )
        b = jax.random.uniform(
            kb, (1, fan_out), jnp.float32, minval=-bound, maxval=bound
        )
        return w, b

    k1, k2, k3 = jax.random.split(key, 3)
    w1, b1 = linear(k1, input_dim, HIDDEN)
    w2, b2 = linear(k2, HIDDEN, HIDDEN)
    w3, b3 = linear(k3, HIDDEN, OUT_DIM)
    return (w1, b1, w2, b2, w3, b3)


def _reference_forward(z, params):
    """Pure-JAX reference with the same bf16-input / f32-accumulate matmuls."""
    w1, b1, w2, b2, w3, b3 = params
    bf = jnp.bfloat16
    h = z.reshape(z.shape[0], -1).astype(jnp.float32)
    h1 = jnp.tanh(jnp.dot(h.astype(bf), w1.astype(bf),
                          preferred_element_type=jnp.float32) + b1)
    h2 = jnp.tanh(jnp.dot(h1.astype(bf), w2.astype(bf),
                          preferred_element_type=jnp.float32) + b2)
    out = jnp.dot(h2.astype(bf), w3.astype(bf),
                  preferred_element_type=jnp.float32) + b3
    return out.reshape(z.shape[0], 1, 28, 28)


if __name__ == "__main__":
    key = jax.random.PRNGKey(0)
    k_param, k_z = jax.random.split(key)

    batch = 2
    input_dim = 32  # latent dimension

    params = init_params(k_param, input_dim)
    prepared = prepare_params(params)
    z = jax.random.normal(k_z, (batch, input_dim), dtype=jnp.float32)

    mu_img = mnist_decoder_forward(z, prepared)
    mu_img = jax.block_until_ready(mu_img)

    assert mu_img.shape == (batch, 1, 28, 28), mu_img.shape
    ref = _reference_forward(z, params)
    # bf16 matmul inputs -> looser tolerance than the original f32 kernel.
    assert jnp.allclose(mu_img, ref, atol=1e-2, rtol=1e-2), float(
        jnp.max(jnp.abs(mu_img - ref))
    )

    print("KERNEL_OK")
</pallas_src>

<mosaic_0001>
module attributes {stable_mosaic.version = 11 : i64} {
  func.func @_decoder_kernel(%arg0: i32, %arg1: memref<8x32xbf16, #tpu.memory_space<vmem>>, %arg2: memref<32x512xbf16, #tpu.memory_space<vmem>>, %arg3: memref<1x512xf32, #tpu.memory_space<vmem>>, %arg4: memref<512x512xbf16, #tpu.memory_space<vmem>>, %arg5: memref<1x512xf32, #tpu.memory_space<vmem>>, %arg6: memref<512x896xbf16, #tpu.memory_space<vmem>>, %arg7: memref<1x896xf32, #tpu.memory_space<vmem>>, %arg8: memref<8x896xf32, #tpu.memory_space<vmem>>) attributes {dimension_semantics = [#tpu.dimension_semantics<parallel>], iteration_bounds = array<i64: 1>, scalar_prefetch = 0 : i64, scratch_operands = 0 : i64, tpu.core_type = #tpu.core_type<tc>, window_params = [{transform_indices = @transform_0, window_bounds = array<i64: 8, 32>}, {pipeline_mode = #tpu.pipeline_mode<synchronous>, transform_indices = @transform_1, window_bounds = array<i64: 32, 512>}, {pipeline_mode = #tpu.pipeline_mode<synchronous>, transform_indices = @transform_2, window_bounds = array<i64: 1, 512>}, {pipeline_mode = #tpu.pipeline_mode<synchronous>, transform_indices = @transform_3, window_bounds = array<i64: 512, 512>}, {pipeline_mode = #tpu.pipeline_mode<synchronous>, transform_indices = @transform_4, window_bounds = array<i64: 1, 512>}, {pipeline_mode = #tpu.pipeline_mode<synchronous>, transform_indices = @transform_5, window_bounds = array<i64: 512, 896>}, {pipeline_mode = #tpu.pipeline_mode<synchronous>, transform_indices = @transform_6, window_bounds = array<i64: 1, 896>}, {transform_indices = @transform_7, window_bounds = array<i64: 8, 896>}]} {
    %c0 = arith.constant 0 : index
    %c0_0 = arith.constant 0 : index
    %0 = vector.load %arg1[%c0, %c0_0] : memref<8x32xbf16, #tpu.memory_space<vmem>>, vector<8x32xbf16>
    %c0_1 = arith.constant 0 : index
    %c0_2 = arith.constant 0 : index
    %1 = vector.load %arg2[%c0_1, %c0_2] : memref<32x512xbf16, #tpu.memory_space<vmem>>, vector<32x512xbf16>
    %cst = arith.constant dense<0.000000e+00> : vector<8x512xf32>
    %2 = tpu.matmul %0, %1, %cst {dimension_numbers = #tpu.dot_dimension_numbers<[1], [0], [0], [1], [0, 0, 1, 1], [], []>} : vector<8x32xbf16>, vector<32x512xbf16>, vector<8x512xf32> -> vector<8x512xf32>
    %c0_3 = arith.constant 0 : index
    %c0_4 = arith.constant 0 : index
    %3 = vector.load %arg3[%c0_3, %c0_4] : memref<1x512xf32, #tpu.memory_space<vmem>>, vector<1x512xf32>
    %4 = vector.broadcast %3 : vector<1x512xf32> to vector<8x512xf32>
    %5 = arith.addf %2, %4 : vector<8x512xf32>
    %6 = math.tanh %5 : vector<8x512xf32>
    %7 = arith.truncf %6 : vector<8x512xf32> to vector<8x512xbf16>
    %c0_5 = arith.constant 0 : index
    %c0_6 = arith.constant 0 : index
    %8 = vector.load %arg4[%c0_5, %c0_6] : memref<512x512xbf16, #tpu.memory_space<vmem>>, vector<512x512xbf16>
    %cst_7 = arith.constant dense<0.000000e+00> : vector<8x512xf32>
    %9 = tpu.matmul %7, %8, %cst_7 {dimension_numbers = #tpu.dot_dimension_numbers<[1], [0], [0], [1], [0, 0, 1, 1], [], []>} : vector<8x512xbf16>, vector<512x512xbf16>, vector<8x512xf32> -> vector<8x512xf32>
    %c0_8 = arith.constant 0 : index
    %c0_9 = arith.constant 0 : index
    %10 = vector.load %arg5[%c0_8, %c0_9] : memref<1x512xf32, #tpu.memory_space<vmem>>, vector<1x512xf32>
    %11 = vector.broadcast %10 : vector<1x512xf32> to vector<8x512xf32>
    %12 = arith.addf %9, %11 : vector<8x512xf32>
    %13 = math.tanh %12 : vector<8x512xf32>
    %14 = arith.truncf %13 : vector<8x512xf32> to vector<8x512xbf16>
    %c0_10 = arith.constant 0 : index
    %c0_11 = arith.constant 0 : index
    %15 = vector.load %arg6[%c0_10, %c0_11] : memref<512x896xbf16, #tpu.memory_space<vmem>>, vector<512x896xbf16>
    %cst_12 = arith.constant dense<0.000000e+00> : vector<8x896xf32>
    %16 = tpu.matmul %14, %15, %cst_12 {dimension_numbers = #tpu.dot_dimension_numbers<[1], [0], [0], [1], [0, 0, 1, 1], [], []>} : vector<8x512xbf16>, vector<512x896xbf16>, vector<8x896xf32> -> vector<8x896xf32>
    %c0_13 = arith.constant 0 : index
    %c0_14 = arith.constant 0 : index
    %17 = vector.load %arg7[%c0_13, %c0_14] : memref<1x896xf32, #tpu.memory_space<vmem>>, vector<1x896xf32>
    %18 = vector.broadcast %17 : vector<1x896xf32> to vector<8x896xf32>
    %19 = arith.addf %16, %18 : vector<8x896xf32>
    %c0_15 = arith.constant 0 : index
    %c0_16 = arith.constant 0 : index
    %20 = vector.load %arg8[%c0_15, %c0_16] : memref<8x896xf32, #tpu.memory_space<vmem>>, vector<8x896xf32>
    tpu.vector_store %arg8[%c0_15, %c0_16], %19 {strides = array<i32>} : memref<8x896xf32, #tpu.memory_space<vmem>>, vector<8x896xf32>,
    return
  }
  func.func @transform_0(%arg0: i32) -> (i32, i32) {
    %c0_i32 = arith.constant 0 : i32
    %c0_i32_0 = arith.constant 0 : i32
    return %arg0, %c0_i32 : i32, i32
  }
  func.func @transform_1(%arg0: i32) -> (i32, i32) {
    %c0_i32 = arith.constant 0 : i32
    %c0_i32_0 = arith.constant 0 : i32
    %c0_i32_1 = arith.constant 0 : i32
    return %c0_i32, %c0_i32_0 : i32, i32
  }
  func.func @transform_2(%arg0: i32) -> (i32, i32) {
    %c0_i32 = arith.constant 0 : i32
    %c0_i32_0 = arith.constant 0 : i32
    %c0_i32_1 = arith.constant 0 : i32
    return %c0_i32, %c0_i32_0 : i32, i32
  }
  func.func @transform_3(%arg0: i32) -> (i32, i32) {
    %c0_i32 = arith.constant 0 : i32
    %c0_i32_0 = arith.constant 0 : i32
    %c0_i32_1 = arith.constant 0 : i32
    return %c0_i32, %c0_i32_0 : i32, i32
  }
  func.func @transform_4(%arg0: i32) -> (i32, i32) {
    %c0_i32 = arith.constant 0 : i32
    %c0_i32_0 = arith.constant 0 : i32
    %c0_i32_1 = arith.constant 0 : i32
    return %c0_i32, %c0_i32_0 : i32, i32
  }
  func.func @transform_5(%arg0: i32) -> (i32, i32) {
    %c0_i32 = arith.constant 0 : i32
    %c0_i32_0 = arith.constant 0 : i32
    %c0_i32_1 = arith.constant 0 : i32
    return %c0_i32, %c0_i32_0 : i32, i32
  }
  func.func @transform_6(%arg0: i32) -> (i32, i32) {
    %c0_i32 = arith.constant 0 : i32
    %c0_i32_0 = arith.constant 0 : i32
    %c0_i32_1 = arith.constant 0 : i32
    return %c0_i32, %c0_i32_0 : i32, i32
  }
  func.func @transform_7(%arg0: i32) -> (i32, i32) {
    %c0_i32 = arith.constant 0 : i32
    %c0_i32_0 = arith.constant 0 : i32
    return %arg0, %c0_i32 : i32, i32
  }
}

</mosaic_0001>

<llo_original>
// kernel: tpu_custom_call.1
$region0: #{tpu_custom_call.1}
  #allocation0 [shape = 'u32[]', space=smem, size = 0x4, offset = 0x4, fixed_abs, tag = 'smem constant byte address 0x4 - core index']
  #allocation1 [shape = 'u32[72,128]{1,0:T(1,128)}', space=vmem, size = 0x9000, scoped, tag = 'internal scratch']
  %s0 = inlined_call_operand.hbm [shape: bf16[8,32], index: 0, kind: input, shape index: {}]
  %s1 = inlined_call_operand.hbm [shape: bf16[32,512], index: 1, kind: input, shape index: {}]
  %s2 = inlined_call_operand.hbm [shape: f32[1,512], index: 2, kind: input, shape index: {}]
  %s3 = inlined_call_operand.hbm [shape: bf16[512,512], index: 3, kind: input, shape index: {}]
  %s4 = inlined_call_operand.hbm [shape: f32[1,512], index: 4, kind: input, shape index: {}]
  %s5 = inlined_call_operand.hbm [shape: bf16[512,896], index: 5, kind: input, shape index: {}]
  %s6 = inlined_call_operand.hbm [shape: f32[1,896], index: 6, kind: input, shape index: {}]
  %s7 = inlined_call_operand.hbm [shape: f32[8,896], index: 7, kind: output, shape index: {}]
  %s8 = sld [smem:[#allocation0]]
  $region66: #{tpu_custom_call.1} parent=0
    _
  %s10 = ssub.s32 1, %s8
  %s11 = scalar_select 0, %s10, %s8
  $region1: #{tpu_custom_call.1} parent=0
    #allocation2 [shape = 'u8[2048]{0}', space=vmem, size = 0x800, scoped, tag = 'input window, operand 0, single buffered']
    #allocation3 [shape = 's32[1]{0}', space=sflag, size = 0x4, scoped, tag = 'scoped memory for tpu_custom_call.1']
    #allocation4 [shape = 's32[1]{0}', space=sflag, size = 0x4, scoped, tag = 'scoped memory for tpu_custom_call.1']
    #allocation5 [shape = 'u8[32768]{0}', space=vmem, size = 0x8000, scoped, tag = 'input window, operand 1, single buffered']
    #allocation6 [shape = 's32[1]{0}', space=sflag, size = 0x4, scoped, tag = 'scoped memory for tpu_custom_call.1']
    #allocation7 [shape = 'u8[2048]{0}', space=vmem, size = 0x800, scoped, tag = 'input window, operand 2, single buffered']
    #allocation8 [shape = 'u8[524288]{0}', space=vmem, size = 0x80000, scoped, tag = 'input window, operand 3, single buffered']
    #allocation9 [shape = 's32[1]{0}', space=sflag, size = 0x4, scoped, tag = 'scoped memory for tpu_custom_call.1']
    #allocation10 [shape = 'u8[2048]{0}', space=vmem, size = 0x800, scoped, tag = 'input window, operand 4, single buffered']
    #allocation11 [shape = 'u8[917504]{0}', space=vmem, size = 0xe0000, scoped, tag = 'input window, operand 5, single buffered']
    #allocation12 [shape = 's32[1]{0}', space=sflag, size = 0x4, scoped, tag = 'scoped memory for tpu_custom_call.1']
    #allocation13 [shape = 'u8[3584]{0}', space=vmem, size = 0x1000, scoped, tag = 'input window, operand 6, single buffered']
    #allocation14 [shape = 'u8[28672]{0}', space=vmem, size = 0x7000, scoped, tag = 'output window, operand 0, single buffered']
    %12 = vsyncpa [#allocation3], 0
    %13 = vsyncpa [#allocation6], 0
    %14 = vsyncpa [#allocation9], 0
    %15 = vsyncpa [#allocation12], 0
    %16 = vsyncpa [#allocation4], 0
    // Predicated region
    $region2: #{tpu_custom_call.1} parent=1 // pred_check
      _
    $region3: #{tpu_custom_call.1} parent=1 // pred_check_branch
      %18 = sbr.rel (0) target = $region5
    $region4: #{tpu_custom_call.1} parent=1 // pred_region
      %20 = vsyncadd [#allocation3], 0
      %s22 = sshll.u32 %s0, 4
      %s23 = int_to_ptr.hbm [resolvable:$true] %s22
      %s24 = sshll.u32 [#allocation2], 4
      %s25 = int_to_ptr.vmem [resolvable:$true] %s24
      %27 = dma.hbm_to_vmem [thread:$0]  %s23, 64, %s25, [#allocation3]
    $region5: #{tpu_custom_call.1} parent=1 // pred_fallthru
      _
    // Predicated region
    $region6: #{tpu_custom_call.1} parent=1 // pred_check
      _
    $region7: #{tpu_custom_call.1} parent=1 // pred_check_branch
      %29 = sbr.rel (0) target = $region9
    $region8: #{tpu_custom_call.1} parent=1 // pred_region
      %31 = vsyncadd [#allocation6], 0
      %s32 = sshll.u32 %s1, 4
      %s33 = int_to_ptr.hbm [resolvable:$true] %s32
      %s34 = sshll.u32 [#allocation5], 4
      %s35 = int_to_ptr.vmem [resolvable:$true] %s34
      %40 = dma.hbm_to_vmem [thread:$0]  %s33, 1024, %s35, [#allocation6], 256, 256, 16
    $region9: #{tpu_custom_call.1} parent=1 // pred_fallthru
      _
    // Predicated region
    $region10: #{tpu_custom_call.1} parent=1 // pred_check
      _
    $region11: #{tpu_custom_call.1} parent=1 // pred_check_branch
      %42 = sbr.rel (0) target = $region13
    $region12: #{tpu_custom_call.1} parent=1 // pred_region
      %44 = vsyncadd [#allocation6], 0
      %s46 = sshll.u32 %s2, 4
      %s47 = int_to_ptr.hbm [resolvable:$true] %s46
      %s48 = sshll.u32 [#allocation7], 4
      %s49 = int_to_ptr.vmem [resolvable:$true] %s48
      %51 = dma.hbm_to_vmem [thread:$0]  %s47, 64, %s49, [#allocation6]
    $region13: #{tpu_custom_call.1} parent=1 // pred_fallthru
      _
    // Predicated region
    $region14: #{tpu_custom_call.1} parent=1 // pred_check
      _
    $region15: #{tpu_custom_call.1} parent=1 // pred_check_branch
      %53 = sbr.rel (0) target = $region17
    $region16: #{tpu_custom_call.1} parent=1 // pred_region
      %55 = vsyncadd [#allocation9], 0
      %s56 = sshll.u32 %s3, 4
      %s57 = int_to_ptr.hbm [resolvable:$true] %s56
      %s58 = sshll.u32 [#allocation8], 4
      %s59 = int_to_ptr.vmem [resolvable:$true] %s58
      %64 = dma.hbm_to_vmem [thread:$0]  %s57, 16384, %s59, [#allocation9], 256, 256, 16
    $region17: #{tpu_custom_call.1} parent=1 // pred_fallthru
      _
    // Predicated region
    $region18: #{tpu_custom_call.1} parent=1 // pred_check
      _
    $region19: #{tpu_custom_call.1} parent=1 // pred_check_branch
      %66 = sbr.rel (0) target = $region21
    $region20: #{tpu_custom_call.1} parent=1 // pred_region
      %68 = vsyncadd [#allocation9], 0
      %s70 = sshll.u32 %s4, 4
      %s71 = int_to_ptr.hbm [resolvable:$true] %s70
      %s72 = sshll.u32 [#allocation10], 4
      %s73 = int_to_ptr.vmem [resolvable:$true] %s72
      %75 = dma.hbm_to_vmem [thread:$0]  %s71, 64, %s73, [#allocation9]
    $region21: #{tpu_custom_call.1} parent=1 // pred_fallthru
      _
    // Predicated region
    $region22: #{tpu_custom_call.1} parent=1 // pred_check
      _
    $region23: #{tpu_custom_call.1} parent=1 // pred_check_branch
      %77 = sbr.rel (0) target = $region25
    $region24: #{tpu_custom_call.1} parent=1 // pred_region
      %79 = vsyncadd [#allocation12], 0
      %s80 = sshll.u32 %s5, 4
      %s81 = int_to_ptr.hbm [resolvable:$true] %s80
      %s82 = sshll.u32 [#allocation11], 4
      %s83 = int_to_ptr.vmem [resolvable:$true] %s82
      %88 = dma.hbm_to_vmem [thread:$0]  %s81, 28672, %s83, [#allocation12], 448, 448, 28
    $region25: #{tpu_custom_call.1} parent=1 // pred_fallthru
      _
    // Predicated region
    $region26: #{tpu_custom_call.1} parent=1 // pred_check
      _
    $region27: #{tpu_custom_call.1} parent=1 // pred_check_branch
      %90 = sbr.rel (0) target = $region29
    $region28: #{tpu_custom_call.1} parent=1 // pred_region
      %92 = vsyncadd [#allocation12], 0
      %s94 = sshll.u32 %s6, 4
      %s95 = int_to_ptr.hbm [resolvable:$true] %s94
      %s96 = sshll.u32 [#allocation13], 4
      %s97 = int_to_ptr.vmem [resolvable:$true] %s96
      %99 = dma.hbm_to_vmem [thread:$0]  %s95, 112, %s97, [#allocation12]
    $region29: #{tpu_custom_call.1} parent=1 // pred_fallthru
      _
    // Predicated region
    $region30: #{tpu_custom_call.1} parent=1 // pred_check
      _
    $region31: #{tpu_custom_call.1} parent=1 // pred_check_branch
      %101 = sbr.rel (0) target = $region33
    $region32: #{tpu_custom_call.1} parent=1 // pred_region
      %103 = dma.done [#allocation3], 64
    $region33: #{tpu_custom_call.1} parent=1 // pred_fallthru
      _
    // Predicated region
    $region34: #{tpu_custom_call.1} parent=1 // pred_check
      _
    $region35: #{tpu_custom_call.1} parent=1 // pred_check_branch
      %105 = sbr.rel (0) target = $region37
    $region36: #{tpu_custom_call.1} parent=1 // pred_region
      %107 = dma.done [#allocation6], 1024
    $region37: #{tpu_custom_call.1} parent=1 // pred_fallthru
      _
    // Predicated region
    $region38: #{tpu_custom_call.1} parent=1 // pred_check
      _
    $region39: #{tpu_custom_call.1} parent=1 // pred_check_branch
      %109 = sbr.rel (0) target = $region41
    $region40: #{tpu_custom_call.1} parent=1 // pred_region
      %111 = dma.done [#allocation6], 64
    $region41: #{tpu_custom_call.1} parent=1 // pred_fallthru
      _
    // Predicated region
    $region42: #{tpu_custom_call.1} parent=1 // pred_check
      _
    $region43: #{tpu_custom_call.1} parent=1 // pred_check_branch
      %113 = sbr.rel (0) target = $region45
    $region44: #{tpu_custom_call.1} parent=1 // pred_region
      %115 = dma.done [#allocation9], 16384
    $region45: #{tpu_custom_call.1} parent=1 // pred_fallthru
      _
    // Predicated region
    $region46: #{tpu_custom_call.1} parent=1 // pred_check
      _
    $region47: #{tpu_custom_call.1} parent=1 // pred_check_branch
      %117 = sbr.rel (0) target = $region49
    $region48: #{tpu_custom_call.1} parent=1 // pred_region
      %119 = dma.done [#allocation9], 64
    $region49: #{tpu_custom_call.1} parent=1 // pred_fallthru
      _
    // Predicated region
    $region50: #{tpu_custom_call.1} parent=1 // pred_check
      _
    $region51: #{tpu_custom_call.1} parent=1 // pred_check_branch
      %121 = sbr.rel (0) target = $region53
    $region52: #{tpu_custom_call.1} parent=1 // pred_region
      %123 = dma.done [#allocation12], 28672
    $region53: #{tpu_custom_call.1} parent=1 // pred_fallthru
      _
    // Predicated region
    $region54: #{tpu_custom_call.1} parent=1 // pred_check
      _
    $region55: #{tpu_custom_call.1} parent=1 // pred_check_branch
      %125 = sbr.rel (0) target = $region57
    $region56: #{tpu_custom_call.1} parent=1 // pred_region
      %127 = dma.done [#allocation12], 112
    $region57: #{tpu_custom_call.1} parent=1 // pred_fallthru
      _
    %v129 = vld [vmem:[#allocation2] sm:$0xf]
    %v130 = vld [vmem:[#allocation5] sm:$0xff]
    %v131 = vld [vmem:[#allocation5 + $0x8] sm:$0xff]
    %v132 = vld [vmem:[#allocation5 + $0x10] sm:$0xff]
    %v133 = vld [vmem:[#allocation5 + $0x18] sm:$0xff]
    %v134 = vld [vmem:[#allocation5 + $0x20] sm:$0xff]
    %v135 = vld [vmem:[#allocation5 + $0x28] sm:$0xff]
    %v136 = vld [vmem:[#allocation5 + $0x30] sm:$0xff]
    %v137 = vld [vmem:[#allocation5 + $0x38] sm:$0xff]
    %v138 = vld [vmem:[#allocation7] sm:$0xf]
    %v140 = vperm.slane %v138, 0
    %v141 = vperm.slane %v138, 1
    %v142 = vperm.slane %v138, 2
    %v143 = vperm.slane %v138, 3
    %v156 = vunpack.c.l.b16 %v130
    %v157 = vunpack.c.h.b16 %v130
    %v158 = vunpack.c.l.b16 %v131
    %v159 = vunpack.c.h.b16 %v131
    %v160 = vunpack.c.l.b16 %v132
    %v161 = vunpack.c.h.b16 %v132
    %v162 = vunpack.c.l.b16 %v133
    %v163 = vunpack.c.h.b16 %v133
    %v164 = vunpack.c.l.b16 %v134
    %v165 = vunpack.c.h.b16 %v134
    %v166 = vunpack.c.l.b16 %v135
    %v167 = vunpack.c.h.b16 %v135
    %v168 = vunpack.c.l.b16 %v136
    %v169 = vunpack.c.h.b16 %v136
    %v170 = vunpack.c.l.b16 %v137
    %v171 = vunpack.c.h.b16 %v137
    %v172 = vpack.c.b16 %v160, %v156
    %v173 = vpack.c.b16 %v161, %v157
    %v174 = vpack.c.b16 %v162, %v158
    %v175 = vpack.c.b16 %v163, %v159
    %v176 = vpack.c.b16 %v168, %v164
    %v177 = vpack.c.b16 %v169, %v165
    %v178 = vpack.c.b16 %v170, %v166
    %v179 = vpack.c.b16 %v171, %v167
    %vm188 = vcmask 261120
    %v190 = vsel %vm188, %v129, 0
    %192 = vmatpush.bf16.msra.mxu0 0
    %193 = vmatpush.bf16.msra.mxu0 0
    %194 = vmatpush.bf16.msra.mxu0 0
    %195 = vmatpush.bf16.msra.mxu0 0
    %196 = vmatpush.bf16.msra.mxu0 0
    %197 = vmatpush.bf16.msra.mxu0 0
    %198 = vmatpush.bf16.msra.mxu0 %v176
    %199 = vmatpush.bf16.msra.mxu0 %v172
    %200 = vmatmul.bf16.gmra.mxu0 %v190
    %v201 = vpop.f32.mrf.mxu0
    %v202 = vadd.f32 %v140, %v201
    %v203 = vpop.f32.mrf.mxu0
    %204 = vdwg.mxu0
    %205 = vmatpush.bf16.msra.mxu0 0
    %206 = vmatpush.bf16.msra.mxu0 0
    %207 = vmatpush.bf16.msra.mxu0 0
    %208 = vmatpush.bf16.msra.mxu0 0
    %209 = vmatpush.bf16.msra.mxu0 0
    %210 = vmatpush.bf16.msra.mxu0 0
    %211 = vmatpush.bf16.msra.mxu0 %v177
    %212 = vmatpush.bf16.msra.mxu0 %v173
    %213 = vmatmul.bf16.gmra.mxu0 %v190
    %v214 = vpop.f32.mrf.mxu0
    %v215 = vadd.f32 %v141, %v214
    %v216 = vpop.f32.mrf.mxu0
    %217 = vdwg.mxu0
    %218 = vmatpush.bf16.msra.mxu0 0
    %219 = vmatpush.bf16.msra.mxu0 0
    %220 = vmatpush.bf16.msra.mxu0 0
    %221 = vmatpush.bf16.msra.mxu0 0
    %222 = vmatpush.bf16.msra.mxu0 0
    %223 = vmatpush.bf16.msra.mxu0 0
    %224 = vmatpush.bf16.msra.mxu0 %v178
    %225 = vmatpush.bf16.msra.mxu0 %v174
    %226 = vmatmul.bf16.gmra.mxu0 %v190
    %v227 = vpop.f32.mrf.mxu0
    %v228 = vadd.f32 %v142, %v227
    %v229 = vpop.f32.mrf.mxu0
    %230 = vdwg.mxu0
    %231 = vmatpush.bf16.msra.mxu0 0
    %232 = vmatpush.bf16.msra.mxu0 0
    %233 = vmatpush.bf16.msra.mxu0 0
    %234 = vmatpush.bf16.msra.mxu0 0
    %235 = vmatpush.bf16.msra.mxu0 0
    %236 = vmatpush.bf16.msra.mxu0 0
    %237 = vmatpush.bf16.msra.mxu0 %v179
    %238 = vmatpush.bf16.msra.mxu0 %v175
    %239 = vmatmul.bf16.gmra.mxu0 %v190
    %v240 = vpop.f32.mrf.mxu0
    %v241 = vadd.f32 %v143, %v240
    %v242 = vpop.f32.mrf.mxu0
    %243 = vdwg.mxu0
    %v244 = vtanh.pop %v202
    %v245 = vtanh.pop %v215
    %v246 = vtanh.pop %v228
    %v247 = vtanh.pop %v241
    %v248 = vpack.c.bf16 %v244, %v244
    %v249 = vpack.c.bf16 %v245, %v245
    %v250 = vpack.c.bf16 %v246, %v246
    %v251 = vpack.c.bf16 %v247, %v247
    %v252 = vld [vmem:[#allocation8] sm:$0xff]
    %v253 = vld [vmem:[#allocation8 + $0x8] sm:$0xff]
    %v254 = vld [vmem:[#allocation8 + $0x10] sm:$0xff]
    %v255 = vld [vmem:[#allocation8 + $0x18] sm:$0xff]
    %v256 = vld [vmem:[#allocation8 + $0x20] sm:$0xff]
    %v257 = vld [vmem:[#allocation8 + $0x28] sm:$0xff]
    %v258 = vld [vmem:[#allocation8 + $0x30] sm:$0xff]
    %v259 = vld [vmem:[#allocation8 + $0x38] sm:$0xff]
    %v260 = vld [vmem:[#allocation8 + $0x40] sm:$0xff]
    %v261 = vld [vmem:[#allocation8 + $0x48] sm:$0xff]
    %v262 = vld [vmem:[#allocation8 + $0x50] sm:$0xff]
    %v263 = vld [vmem:[#allocation8 + $0x58] sm:$0xff]
    %v264 = vld [vmem:[#allocation8 + $0x60] sm:$0xff]
    %v265 = vld [vmem:[#allocation8 + $0x68] sm:$0xff]
    %v266 = vld [vmem:[#allocation8 + $0x70] sm:$0xff]
    %v267 = vld [vmem:[#allocation8 + $0x78] sm:$0xff]
    %v268 = vld [vmem:[#allocation8 + $0x80] sm:$0xff]
    %v269 = vld [vmem:[#allocation8 + $0x88] sm:$0xff]
    %v270 = vld [vmem:[#allocation8 + $0x90] sm:$0xff]
    %v271 = vld [vmem:[#allocation8 + $0x98] sm:$0xff]
    %v272 = vld [vmem:[#allocation8 + $0xa0] sm:$0xff]
    %v273 = vld [vmem:[#allocation8 + $0xa8] sm:$0xff]
    %v274 = vld [vmem:[#allocation8 + $0xb0] sm:$0xff]
    %v275 = vld [vmem:[#allocation8 + $0xb8] sm:$0xff]
    %v276 = vld [vmem:[#allocation8 + $0xc0] sm:$0xff]
    %v277 = vld [vmem:[#allocation8 + $0xc8] sm:$0xff]
    %v278 = vld [vmem:[#allocation8 + $0xd0] sm:$0xff]
    %v279 = vld [vmem:[#allocation8 + $0xd8] sm:$0xff]
    %v280 = vld [vmem:[#allocation8 + $0xe0] sm:$0xff]
    %v281 = vld [vmem:[#allocation8 + $0xe8] sm:$0xff]
    %v282 = vld [vmem:[#allocation8 + $0xf0] sm:$0xff]
    %v283 = vld [vmem:[#allocation8 + $0xf8] sm:$0xff]
    %v284 = vld [vmem:[#allocation8 + $0x100] sm:$0xff]
    %v285 = vld [vmem:[#allocation8 + $0x108] sm:$0xff]
    %v286 = vld [vmem:[#allocation8 + $0x110] sm:$0xff]
    %v287 = vld [vmem:[#allocation8 + $0x118] sm:$0xff]
    %v288 = vld [vmem:[#allocation8 + $0x120] sm:$0xff]
    %v289 = vld [vmem:[#allocation8 + $0x128] sm:$0xff]
    %v290 = vld [vmem:[#allocation8 + $0x130] sm:$0xff]
    %v291 = vld [vmem:[#allocation8 + $0x138] sm:$0xff]
    %v292 = vld [vmem:[#allocation8 + $0x140] sm:$0xff]
    %v293 = vld [vmem:[#allocation8 + $0x148] sm:$0xff]
    %v294 = vld [vmem:[#allocation8 + $0x150] sm:$0xff]
    %v295 = vld [vmem:[#allocation8 + $0x158] sm:$0xff]
    %v296 = vld [vmem:[#allocation8 + $0x160] sm:$0xff]
    %v297 = vld [vmem:[#allocation8 + $0x168] sm:$0xff]
    %v298 = vld [vmem:[#allocation8 + $0x170] sm:$0xff]
    %v299 = vld [vmem:[#allocation8 + $0x178] sm:$0xff]
    %v300 = vld [vmem:[#allocation8 + $0x180] sm:$0xff]
    %v301 = vld [vmem:[#allocation8 + $0x188] sm:$0xff]
    %v302 = vld [vmem:[#allocation8 + $0x190] sm:$0xff]
    %v303 = vld [vmem:[#allocation8 + $0x198] sm:$0xff]
    %v304 = vld [vmem:[#allocation8 + $0x1a0] sm:$0xff]
    %v305 = vld [vmem:[#allocation8 + $0x1a8] sm:$0xff]
    %v306 = vld [vmem:[#allocation8 + $0x1b0] sm:$0xff]
    %v307 = vld [vmem:[#allocation8 + $0x1b8] sm:$0xff]
    %v308 = vld [vmem:[#allocation8 + $0x1c0] sm:$0xff]
    %v309 = vld [vmem:[#allocation8 + $0x1c8] sm:$0xff]
    %v310 = vld [vmem:[#allocation8 + $0x1d0] sm:$0xff]
    %v311 = vld [vmem:[#allocation8 + $0x1d8] sm:$0xff]
    %v312 = vld [vmem:[#allocation8 + $0x1e0] sm:$0xff]
    %v313 = vld [vmem:[#allocation8 + $0x1e8] sm:$0xff]
    %v314 = vld [vmem:[#allocation8 + $0x1f0] sm:$0xff]
    %v315 = vld [vmem:[#allocation8 + $0x1f8] sm:$0xff]
    %v316 = vld [vmem:[#allocation8 + $0x200] sm:$0xff]
    %v317 = vld [vmem:[#allocation8 + $0x208] sm:$0xff]
    %v318 = vld [vmem:[#allocation8 + $0x210] sm:$0xff]
    %v319 = vld [vmem:[#allocation8 + $0x218] sm:$0xff]
    %v320 = vld [vmem:[#allocation8 + $0x220] sm:$0xff]
    %v321 = vld [vmem:[#allocation8 + $0x228] sm:$0xff]
    %v322 = vld [vmem:[#allocation8 + $0x230] sm:$0xff]
    %v323 = vld [vmem:[#allocation8 + $0x238] sm:$0xff]
    %v324 = vld [vmem:[#allocation8 + $0x240] sm:$0xff]
    %v325 = vld [vmem:[#allocation8 + $0x248] sm:$0xff]
    %v326 = vld [vmem:[#allocation8 + $0x250] sm:$0xff]
    %v327 = vld [vmem:[#allocation8 + $0x258] sm:$0xff]
    %v328 = vld [vmem:[#allocation8 + $0x260] sm:$0xff]
    %v329 = vld [vmem:[#allocation8 + $0x268] sm:$0xff]
    %v330 = vld [vmem:[#allocation8 + $0x270] sm:$0xff]
    %v331 = vld [vmem:[#allocation8 + $0x278] sm:$0xff]
    %v332 = vld [vmem:[#allocation8 + $0x280] sm:$0xff]
    %v333 = vld [vmem:[#allocation8 + $0x288] sm:$0xff]
    %v334 = vld [vmem:[#allocation8 + $0x290] sm:$0xff]
    %v335 = vld [vmem:[#allocation8 + $0x298] sm:$0xff]
    %v336 = vld [vmem:[#allocation8 + $0x2a0] sm:$0xff]
    %v337 = vld [vmem:[#allocation8 + $0x2a8] sm:$0xff]
    %v338 = vld [vmem:[#allocation8 + $0x2b0] sm:$0xff]
    %v339 = vld [vmem:[#allocation8 + $0x2b8] sm:$0xff]
    %v340 = vld [vmem:[#allocation8 + $0x2c0] sm:$0xff]
    %v341 = vld [vmem:[#allocation8 + $0x2c8] sm:$0xff]
    %v342 = vld [vmem:[#allocation8 + $0x2d0] sm:$0xff]
    %v343 = vld [vmem:[#allocation8 + $0x2d8] sm:$0xff]
    %v344 = vld [vmem:[#allocation8 + $0x2e0] sm:$0xff]
    %v345 = vld [vmem:[#allocation8 + $0x2e8] sm:$0xff]
    %v346 = vld [vmem:[#allocation8 + $0x2f0] sm:$0xff]
    %v347 = vld [vmem:[#allocation8 + $0x2f8] sm:$0xff]
    %v348 = vld [vmem:[#allocation8 + $0x300] sm:$0xff]
    %v349 = vld [vmem:[#allocation8 + $0x308] sm:$0xff]
    %v350 = vld [vmem:[#allocation8 + $0x310] sm:$0xff]
    %v351 = vld [vmem:[#allocation8 + $0x318] sm:$0xff]
    %v352 = vld [vmem:[#allocation8 + $0x320] sm:$0xff]
    %v353 = vld [vmem:[#allocation8 + $0x328] sm:$0xff]
    %v354 = vld [vmem:[#allocation8 + $0x330] sm:$0xff]
    %v355 = vld [vmem:[#allocation8 + $0x338] sm:$0xff]
    %v356 = vld [vmem:[#allocation8 + $0x340] sm:$0xff]
    %v357 = vld [vmem:[#allocation8 + $0x348] sm:$0xff]
    %v358 = vld [vmem:[#allocation8 + $0x350] sm:$0xff]
    %v359 = vld [vmem:[#allocation8 + $0x358] sm:$0xff]
    %v360 = vld [vmem:[#allocation8 + $0x360] sm:$0xff]
    %v361 = vld [vmem:[#allocation8 + $0x368] sm:$0xff]
    %v362 = vld [vmem:[#allocation8 + $0x370] sm:$0xff]
    %v363 = vld [vmem:[#allocation8 + $0x378] sm:$0xff]
    %v364 = vld [vmem:[#allocation8 + $0x380] sm:$0xff]
    %v365 = vld [vmem:[#allocation8 + $0x388] sm:$0xff]
    %v366 = vld [vmem:[#allocation8 + $0x390] sm:$0xff]
    %v367 = vld [vmem:[#allocation8 + $0x398] sm:$0xff]
    %v368 = vld [vmem:[#allocation8 + $0x3a0] sm:$0xff]
    %v369 = vld [vmem:[#allocation8 + $0x3a8] sm:$0xff]
    %v370 = vld [vmem:[#allocation8 + $0x3b0] sm:$0xff]
    %v371 = vld [vmem:[#allocation8 + $0x3b8] sm:$0xff]
    %v372 = vld [vmem:[#allocation8 + $0x3c0] sm:$0xff]
    %v373 = vld [vmem:[#allocation8 + $0x3c8] sm:$0xff]
    %v374 = vld [vmem:[#allocation8 + $0x3d0] sm:$0xff]
    %v375 = vld [vmem:[#allocation8 + $0x3d8] sm:$0xff]
    %v376 = vld [vmem:[#allocation8 + $0x3e0] sm:$0xff]
    %v377 = vld [vmem:[#allocation8 + $0x3e8] sm:$0xff]
    %v378 = vld [vmem:[#allocation8 + $0x3f0] sm:$0xff]
    %v379 = vld [vmem:[#allocation8 + $0x3f8] sm:$0xff]
    %v380 = vld [vmem:[#allocation10] sm:$0xf]
    %v382 = vperm.slane %v380, 0
    %v383 = vperm.slane %v380, 1
    %v384 = vperm.slane %v380, 2
    %v385 = vperm.slane %v380, 3
    %v518 = vunpack.c.l.b16 %v252
    %v519 = vunpack.c.h.b16 %v252
    %v520 = vunpack.c.l.b16 %v253
    %v521 = vunpack.c.h.b16 %v253
    %v522 = vunpack.c.l.b16 %v254
    %v523 = vunpack.c.h.b16 %v254
    %v524 = vunpack.c.l.b16 %v255
    %v525 = vunpack.c.h.b16 %v255
    %v526 = vunpack.c.l.b16 %v256
    %v527 = vunpack.c.h.b16 %v256
    %v528 = vunpack.c.l.b16 %v257
    %v529 = vunpack.c.h.b16 %v257
    %v530 = vunpack.c.l.b16 %v258
    %v531 = vunpack.c.h.b16 %v258
    %v532 = vunpack.c.l.b16 %v259
    %v533 = vunpack.c.h.b16 %v259
    %v534 = vunpack.c.l.b16 %v260
    %v535 = vunpack.c.h.b16 %v260
    %v536 = vunpack.c.l.b16 %v261
    %v537 = vunpack.c.h.b16 %v261
    %v538 = vunpack.c.l.b16 %v262
    %v539 = vunpack.c.h.b16 %v262
    %v540 = vunpack.c.l.b16 %v263
    %v541 = vunpack.c.h.b16 %v263
    %v542 = vunpack.c.l.b16 %v264
    %v543 = vunpack.c.h.b16 %v264
    %v544 = vunpack.c.l.b16 %v265
    %v545 = vunpack.c.h.b16 %v265
    %v546 = vunpack.c.l.b16 %v266
    %v547 = vunpack.c.h.b16 %v266
    %v548 = vunpack.c.l.b16 %v267
    %v549 = vunpack.c.h.b16 %v267
    %v550 = vunpack.c.l.b16 %v268
    %v551 = vunpack.c.h.b16 %v268
    %v552 = vunpack.c.l.b16 %v269
    %v553 = vunpack.c.h.b16 %v269
    %v554 = vunpack.c.l.b16 %v270
    %v555 = vunpack.c.h.b16 %v270
    %v556 = vunpack.c.l.b16 %v271
    %v557 = vunpack.c.h.b16 %v271
    %v558 = vunpack.c.l.b16 %v272
    %v559 = vunpack.c.h.b16 %v272
    %v560 = vunpack.c.l.b16 %v273
    %v561 = vunpack.c.h.b16 %v273
    %v562 = vunpack.c.l.b16 %v274
    %v563 = vunpack.c.h.b16 %v274
    %v564 = vunpack.c.l.b16 %v275
    %v565 = vunpack.c.h.b16 %v275
    %v566 = vunpack.c.l.b16 %v276
    %v567 = vunpack.c.h.b16 %v276
    %v568 = vunpack.c.l.b16 %v277
    %v569 = vunpack.c.h.b16 %v277
    %v570 = vunpack.c.l.b16 %v278
    %v571 = vunpack.c.h.b16 %v278
    %v572 = vunpack.c.l.b16 %v279
    %v573 = vunpack.c.h.b16 %v279
    %v574 = vunpack.c.l.b16 %v280
    %v575 = vunpack.c.h.b16 %v280
    %v576 = vunpack.c.l.b16 %v281
    %v577 = vunpack.c.h.b16 %v281
    %v578 = vunpack.c.l.b16 %v282
    %v579 = vunpack.c.h.b16 %v282
    %v580 = vunpack.c.l.b16 %v283
    %v581 = vunpack.c.h.b16 %v283
    %v582 = vunpack.c.l.b16 %v284
    %v583 = vunpack.c.h.b16 %v284
    %v584 = vunpack.c.l.b16 %v285
    %v585 = vunpack.c.h.b16 %v285
    %v586 = vunpack.c.l.b16 %v286
    %v587 = vunpack.c.h.b16 %v286
    %v588 = vunpack.c.l.b16 %v287
    %v589 = vunpack.c.h.b16 %v287
    %v590 = vunpack.c.l.b16 %v288
    %v591 = vunpack.c.h.b16 %v288
    %v592 = vunpack.c.l.b16 %v289
    %v593 = vunpack.c.h.b16 %v289
    %v594 = vunpack.c.l.b16 %v290
    %v595 = vunpack.c.h.b16 %v290
    %v596 = vunpack.c.l.b16 %v291
    %v597 = vunpack.c.h.b16 %v291
    %v598 = vunpack.c.l.b16 %v292
    %v599 = vunpack.c.h.b16 %v292
    %v600 = vunpack.c.l.b16 %v293
    %v601 = vunpack.c.h.b16 %v293
    %v602 = vunpack.c.l.b16 %v294
    %v603 = vunpack.c.h.b16 %v294
    %v604 = vunpack.c.l.b16 %v295
    %v605 = vunpack.c.h.b16 %v295
    %v606 = vunpack.c.l.b16 %v296
    %v607 = vunpack.c.h.b16 %v296
    %v608 = vunpack.c.l.b16 %v297
    %v609 = vunpack.c.h.b16 %v297
    %v610 = vunpack.c.l.b16 %v298
    %v611 = vunpack.c.h.b16 %v298
    %v612 = vunpack.c.l.b16 %v299
    %v613 = vunpack.c.h.b16 %v299
    %v614 = vunpack.c.l.b16 %v300
    %v615 = vunpack.c.h.b16 %v300
    %v616 = vunpack.c.l.b16 %v301
    %v617 = vunpack.c.h.b16 %v301
    %v618 = vunpack.c.l.b16 %v302
    %v619 = vunpack.c.h.b16 %v302
    %v620 = vunpack.c.l.b16 %v303
    %v621 = vunpack.c.h.b16 %v303
    %v622 = vunpack.c.l.b16 %v304
    %v623 = vunpack.c.h.b16 %v304
    %v624 = vunpack.c.l.b16 %v305
    %v625 = vunpack.c.h.b16 %v305
    %v626 = vunpack.c.l.b16 %v306
    %v627 = vunpack.c.h.b16 %v306
    %v628 = vunpack.c.l.b16 %v307
    %v629 = vunpack.c.h.b16 %v307
    %v630 = vunpack.c.l.b16 %v308
    %v631 = vunpack.c.h.b16 %v308
    %v632 = vunpack.c.l.b16 %v309
    %v633 = vunpack.c.h.b16 %v309
    %v634 = vunpack.c.l.b16 %v310
    %v635 = vunpack.c.h.b16 %v310
    %v636 = vunpack.c.l.b16 %v311
    %v637 = vunpack.c.h.b16 %v311
    %v638 = vunpack.c.l.b16 %v312
    %v639 = vunpack.c.h.b16 %v312
    %v640 = vunpack.c.l.b16 %v313
    %v641 = vunpack.c.h.b16 %v313
    %v642 = vunpack.c.l.b16 %v314
    %v643 = vunpack.c.h.b16 %v314
    %v644 = vunpack.c.l.b16 %v315
    %v645 = vunpack.c.h.b16 %v315
    %v646 = vunpack.c.l.b16 %v316
    %v647 = vunpack.c.h.b16 %v316
    %v648 = vunpack.c.l.b16 %v317
    %v649 = vunpack.c.h.b16 %v317
    %v650 = vunpack.c.l.b16 %v318
    %v651 = vunpack.c.h.b16 %v318
    %v652 = vunpack.c.l.b16 %v319
    %v653 = vunpack.c.h.b16 %v319
    %v654 = vunpack.c.l.b16 %v320
    %v655 = vunpack.c.h.b16 %v320
    %v656 = vunpack.c.l.b16 %v321
    %v657 = vunpack.c.h.b16 %v321
    %v658 = vunpack.c.l.b16 %v322
    %v659 = vunpack.c.h.b16 %v322
    %v660 = vunpack.c.l.b16 %v323
    %v661 = vunpack.c.h.b16 %v323
    %v662 = vunpack.c.l.b16 %v324
    %v663 = vunpack.c.h.b16 %v324
    %v664 = vunpack.c.l.b16 %v325
    %v665 = vunpack.c.h.b16 %v325
    %v666 = vunpack.c.l.b16 %v326
    %v667 = vunpack.c.h.b16 %v326
    %v668 = vunpack.c.l.b16 %v327
    %v669 = vunpack.c.h.b16 %v327
    %v670 = vunpack.c.l.b16 %v328
    %v671 = vunpack.c.h.b16 %v328
    %v672 = vunpack.c.l.b16 %v329
    %v673 = vunpack.c.h.b16 %v329
    %v674 = vunpack.c.l.b16 %v330
    %v675 = vunpack.c.h.b16 %v330
    %v676 = vunpack.c.l.b16 %v331
    %v677 = vunpack.c.h.b16 %v331
    %v678 = vunpack.c.l.b16 %v332
    %v679 = vunpack.c.h.b16 %v332
    %v680 = vunpack.c.l.b16 %v333
    %v681 = vunpack.c.h.b16 %v333
    %v682 = vunpack.c.l.b16 %v334
    %v683 = vunpack.c.h.b16 %v334
    %v684 = vunpack.c.l.b16 %v335
    %v685 = vunpack.c.h.b16 %v335
    %v686 = vunpack.c.l.b16 %v336
    %v687 = vunpack.c.h.b16 %v336
    %v688 = vunpack.c.l.b16 %v337
    %v689 = vunpack.c.h.b16 %v337
    %v690 = vunpack.c.l.b16 %v338
    %v691 = vunpack.c.h.b16 %v338
    %v692 = vunpack.c.l.b16 %v339
    %v693 = vunpack.c.h.b16 %v339
    %v694 = vunpack.c.l.b16 %v340
    %v695 = vunpack.c.h.b16 %v340
    %v696 = vunpack.c.l.b16 %v341
    %v697 = vunpack.c.h.b16 %v341
    %v698 = vunpack.c.l.b16 %v342
    %v699 = vunpack.c.h.b16 %v342
    %v700 = vunpack.c.l.b16 %v343
    %v701 = vunpack.c.h.b16 %v343
    %v702 = vunpack.c.l.b16 %v344
    %v703 = vunpack.c.h.b16 %v344
    %v704 = vunpack.c.l.b16 %v345
    %v705 = vunpack.c.h.b16 %v345
    %v706 = vunpack.c.l.b16 %v346
    %v707 = vunpack.c.h.b16 %v346
    %v708 = vunpack.c.l.b16 %v347
    %v709 = vunpack.c.h.b16 %v347
    %v710 = vunpack.c.l.b16 %v348
    %v711 = vunpack.c.h.b16 %v348
    %v712 = vunpack.c.l.b16 %v349
    %v713 = vunpack.c.h.b16 %v349
    %v714 = vunpack.c.l.b16 %v350
    %v715 = vunpack.c.h.b16 %v350
    %v716 = vunpack.c.l.b16 %v351
    %v717 = vunpack.c.h.b16 %v351
    %v718 = vunpack.c.l.b16 %v352
    %v719 = vunpack.c.h.b16 %v352
    %v720 = vunpack.c.l.b16 %v353
    %v721 = vunpack.c.h.b16 %v353
    %v722 = vunpack.c.l.b16 %v354
    %v723 = vunpack.c.h.b16 %v354
    %v724 = vunpack.c.l.b16 %v355
    %v725 = vunpack.c.h.b16 %v355
    %v726 = vunpack.c.l.b16 %v356
    %v727 = vunpack.c.h.b16 %v356
    %v728 = vunpack.c.l.b16 %v357
    %v729 = vunpack.c.h.b16 %v357
    %v730 = vunpack.c.l.b16 %v358
    %v731 = vunpack.c.h.b16 %v358
    %v732 = vunpack.c.l.b16 %v359
    %v733 = vunpack.c.h.b16 %v359
    %v734 = vunpack.c.l.b16 %v360
    %v735 = vunpack.c.h.b16 %v360
    %v736 = vunpack.c.l.b16 %v361
    %v737 = vunpack.c.h.b16 %v361
    %v738 = vunpack.c.l.b16 %v362
    %v739 = vunpack.c.h.b16 %v362
    %v740 = vunpack.c.l.b16 %v363
    %v741 = vunpack.c.h.b16 %v363
    %v742 = vunpack.c.l.b16 %v364
    %v743 = vunpack.c.h.b16 %v364
    %v744 = vunpack.c.l.b16 %v365
    %v745 = vunpack.c.h.b16 %v365
    %v746 = vunpack.c.l.b16 %v366
    %v747 = vunpack.c.h.b16 %v366
    %v748 = vunpack.c.l.b16 %v367
    %v749 = vunpack.c.h.b16 %v367
    %v750 = vunpack.c.l.b16 %v368
    %v751 = vunpack.c.h.b16 %v368
    %v752 = vunpack.c.l.b16 %v369
    %v753 = vunpack.c.h.b16 %v369
    %v754 = vunpack.c.l.b16 %v370
    %v755 = vunpack.c.h.b16 %v370
    %v756 = vunpack.c.l.b16 %v371
    %v757 = vunpack.c.h.b16 %v371
    %v758 = vunpack.c.l.b16 %v372
    %v759 = vunpack.c.h.b16 %v372
    %v760 = vunpack.c.l.b16 %v373
    %v761 = vunpack.c.h.b16 %v373
    %v762 = vunpack.c.l.b16 %v374
    %v763 = vunpack.c.h.b16 %v374
    %v764 = vunpack.c.l.b16 %v375
    %v765 = vunpack.c.h.b16 %v375
    %v766 = vunpack.c.l.b16 %v376
    %v767 = vunpack.c.h.b16 %v376
    %v768 = vunpack.c.l.b16 %v377
    %v769 = vunpack.c.h.b16 %v377
    %v770 = vunpack.c.l.b16 %v378
    %v771 = vunpack.c.h.b16 %v378
    %v772 = vunpack.c.l.b16 %v379
    %v773 = vunpack.c.h.b16 %v379
    %v774 = vpack.c.b16 %v522, %v518
    %v775 = vpack.c.b16 %v523, %v519
    %v776 = vpack.c.b16 %v524, %v520
    %v777 = vpack.c.b16 %v525, %v521
    %v778 = vpack.c.b16 %v530, %v526
    %v779 = vpack.c.b16 %v531, %v527
    %v780 = vpack.c.b16 %v532, %v528
    %v781 = vpack.c.b16 %v533, %v529
    %v782 = vpack.c.b16 %v538, %v534
    %v783 = vpack.c.b16 %v539, %v535
    %v784 = vpack.c.b16 %v540, %v536
    %v785 = vpack.c.b16 %v541, %v537
    %v786 = vpack.c.b16 %v546, %v542
    %v787 = vpack.c.b16 %v547, %v543
    %v788 = vpack.c.b16 %v548, %v544
    %v789 = vpack.c.b16 %v549, %v545
    %v790 = vpack.c.b16 %v554, %v550
    %v791 = vpack.c.b16 %v555, %v551
    %v792 = vpack.c.b16 %v556, %v552
    %v793 = vpack.c.b16 %v557, %v553
    %v794 = vpack.c.b16 %v562, %v558
    %v795 = vpack.c.b16 %v563, %v559
    %v796 = vpack.c.b16 %v564, %v560
    %v797 = vpack.c.b16 %v565, %v561
    %v798 = vpack.c.b16 %v570, %v566
    %v799 = vpack.c.b16 %v571, %v567
    %v800 = vpack.c.b16 %v572, %v568
    %v801 = vpack.c.b16 %v573, %v569
    %v802 = vpack.c.b16 %v578, %v574
    %v803 = vpack.c.b16 %v579, %v575
    %v804 = vpack.c.b16 %v580, %v576
    %v805 = vpack.c.b16 %v581, %v577
    %v806 = vpack.c.b16 %v586, %v582
    %v807 = vpack.c.b16 %v587, %v583
    %v808 = vpack.c.b16 %v588, %v584
    %v809 = vpack.c.b16 %v589, %v585
    %v810 = vpack.c.b16 %v594, %v590
    %v811 = vpack.c.b16 %v595, %v591
    %v812 = vpack.c.b16 %v596, %v592
    %v813 = vpack.c.b16 %v597, %v593
    %v814 = vpack.c.b16 %v602, %v598
    %v815 = vpack.c.b16 %v603, %v599
    %v816 = vpack.c.b16 %v604, %v600
    %v817 = vpack.c.b16 %v605, %v601
    %v818 = vpack.c.b16 %v610, %v606
    %v819 = vpack.c.b16 %v611, %v607
    %v820 = vpack.c.b16 %v612, %v608
    %v821 = vpack.c.b16 %v613, %v609
    %v822 = vpack.c.b16 %v618, %v614
    %v823 = vpack.c.b16 %v619, %v615
    %v824 = vpack.c.b16 %v620, %v616
    %v825 = vpack.c.b16 %v621, %v617
    %v826 = vpack.c.b16 %v626, %v622
    %v827 = vpack.c.b16 %v627, %v623
    %v828 = vpack.c.b16 %v628, %v624
    %v829 = vpack.c.b16 %v629, %v625
    %v830 = vpack.c.b16 %v634, %v630
    %v831 = vpack.c.b16 %v635, %v631
    %v832 = vpack.c.b16 %v636, %v632
    %v833 = vpack.c.b16 %v637, %v633
    %v834 = vpack.c.b16 %v642, %v638
    %v835 = vpack.c.b16 %v643, %v639
    %v836 = vpack.c.b16 %v644, %v640
    %v837 = vpack.c.b16 %v645, %v641
    %v838 = vpack.c.b16 %v650, %v646
    %v839 = vpack.c.b16 %v651, %v647
    %v840 = vpack.c.b16 %v652, %v648
    %v841 = vpack.c.b16 %v653, %v649
    %v842 = vpack.c.b16 %v658, %v654
    %v843 = vpack.c.b16 %v659, %v655
    %v844 = vpack.c.b16 %v660, %v656
    %v845 = vpack.c.b16 %v661, %v657
    %v846 = vpack.c.b16 %v666, %v662
    %v847 = vpack.c.b16 %v667, %v663
    %v848 = vpack.c.b16 %v668, %v664
    %v849 = vpack.c.b16 %v669, %v665
    %v850 = vpack.c.b16 %v674, %v670
    %v851 = vpack.c.b16 %v675, %v671
    %v852 = vpack.c.b16 %v676, %v672
    %v853 = vpack.c.b16 %v677, %v673
    %v854 = vpack.c.b16 %v682, %v678
    %v855 = vpack.c.b16 %v683, %v679
    %v856 = vpack.c.b16 %v684, %v680
    %v857 = vpack.c.b16 %v685, %v681
    %v858 = vpack.c.b16 %v690, %v686
    %v859 = vpack.c.b16 %v691, %v687
    %v860 = vpack.c.b16 %v692, %v688
    %v861 = vpack.c.b16 %v693, %v689
    %v862 = vpack.c.b16 %v698, %v694
    %v863 = vpack.c.b16 %v699, %v695
    %v864 = vpack.c.b16 %v700, %v696
    %v865 = vpack.c.b16 %v701, %v697
    %v866 = vpack.c.b16 %v706, %v702
    %v867 = vpack.c.b16 %v707, %v703
    %v868 = vpack.c.b16 %v708, %v704
    %v869 = vpack.c.b16 %v709, %v705
    %v870 = vpack.c.b16 %v714, %v710
    %v871 = vpack.c.b16 %v715, %v711
    %v872 = vpack.c.b16 %v716, %v712
    %v873 = vpack.c.b16 %v717, %v713
    %v874 = vpack.c.b16 %v722, %v718
    %v875 = vpack.c.b16 %v723, %v719
    %v876 = vpack.c.b16 %v724, %v720
    %v877 = vpack.c.b16 %v725, %v721
    %v878 = vpack.c.b16 %v730, %v726
    %v879 = vpack.c.b16 %v731, %v727
    %v880 = vpack.c.b16 %v732, %v728
    %v881 = vpack.c.b16 %v733, %v729
    %v882 = vpack.c.b16 %v738, %v734
    %v883 = vpack.c.b16 %v739, %v735
    %v884 = vpack.c.b16 %v740, %v736
    %v885 = vpack.c.b16 %v741, %v737
    %v886 = vpack.c.b16 %v746, %v742
    %v887 = vpack.c.b16 %v747, %v743
    %v888 = vpack.c.b16 %v748, %v744
    %v889 = vpack.c.b16 %v749, %v745
    %v890 = vpack.c.b16 %v754, %v750
    %v891 = vpack.c.b16 %v755, %v751
    %v892 = vpack.c.b16 %v756, %v752
    %v893 = vpack.c.b16 %v757, %v753
    %v894 = vpack.c.b16 %v762, %v758
    %v895 = vpack.c.b16 %v763, %v759
    %v896 = vpack.c.b16 %v764, %v760
    %v897 = vpack.c.b16 %v765, %v761
    %v898 = vpack.c.b16 %v770, %v766
    %v899 = vpack.c.b16 %v771, %v767
    %v900 = vpack.c.b16 %v772, %v768
    %v901 = vpack.c.b16 %v773, %v769
    %1030 = vmatpush.bf16.msra.mxu0 %v802
    %1031 = vmatpush.bf16.msra.mxu0 %v798
    %1032 = vmatpush.bf16.msra.mxu0 %v794
    %1033 = vmatpush.bf16.msra.mxu0 %v790
    %1034 = vmatpush.bf16.msra.mxu0 %v786
    %1035 = vmatpush.bf16.msra.mxu0 %v782
    %1036 = vmatpush.bf16.msra.mxu0 %v778
    %1037 = vmatpush.bf16.msra.mxu0 %v774
    %1038 = vmatmul.bf16.gmra.mxu0 %v248
    %v1039 = vpop.f32.mrf.mxu0
    %v1040 = vadd.f32 %v382, %v1039
    %v1041 = vpop.f32.mrf.mxu0
    %1042 = vdwg.mxu0
    %1043 = vmatpush.bf16.msra.mxu0 %v834
    %1044 = vmatpush.bf16.msra.mxu0 %v830
    %1045 = vmatpush.bf16.msra.mxu0 %v826
    %1046 = vmatpush.bf16.msra.mxu0 %v822
    %1047 = vmatpush.bf16.msra.mxu0 %v818
    %1048 = vmatpush.bf16.msra.mxu0 %v814
    %1049 = vmatpush.bf16.msra.mxu0 %v810
    %1050 = vmatpush.bf16.msra.mxu0 %v806
    %1051 = vmatmul.bf16.gmra.mxu0 %v249
    %v1052 = vpop.f32.mrf.mxu0
    %v1053 = vadd.f32 %v1040, %v1052
    %v1054 = vpop.f32.mrf.mxu0
    %1055 = vdwg.mxu0
    %1056 = vmatpush.bf16.msra.mxu0 %v866
    %1057 = vmatpush.bf16.msra.mxu0 %v862
    %1058 = vmatpush.bf16.msra.mxu0 %v858
    %1059 = vmatpush.bf16.msra.mxu0 %v854
    %1060 = vmatpush.bf16.msra.mxu0 %v850
    %1061 = vmatpush.bf16.msra.mxu0 %v846
    %1062 = vmatpush.bf16.msra.mxu0 %v842
    %1063 = vmatpush.bf16.msra.mxu0 %v838
    %1064 = vmatmul.bf16.gmra.mxu0 %v250
    %v1065 = vpop.f32.mrf.mxu0
    %v1066 = vadd.f32 %v1053, %v1065
    %v1067 = vpop.f32.mrf.mxu0
    %1068 = vdwg.mxu0
    %1069 = vmatpush.bf16.msra.mxu0 %v898
    %1070 = vmatpush.bf16.msra.mxu0 %v894
    %1071 = vmatpush.bf16.msra.mxu0 %v890
    %1072 = vmatpush.bf16.msra.mxu0 %v886
    %1073 = vmatpush.bf16.msra.mxu0 %v882
    %1074 = vmatpush.bf16.msra.mxu0 %v878
    %1075 = vmatpush.bf16.msra.mxu0 %v874
    %1076 = vmatpush.bf16.msra.mxu0 %v870
    %1077 = vmatmul.bf16.gmra.mxu0 %v251
    %v1078 = vpop.f32.mrf.mxu0
    %v1079 = vadd.f32 %v1066, %v1078
    %v1080 = vpop.f32.mrf.mxu0
    %1081 = vdwg.mxu0
    %1082 = vmatpush.bf16.msra.mxu0 %v803
    %1083 = vmatpush.bf16.msra.mxu0 %v799
    %1084 = vmatpush.bf16.msra.mxu0 %v795
    %1085 = vmatpush.bf16.msra.mxu0 %v791
    %1086 = vmatpush.bf16.msra.mxu0 %v787
    %1087 = vmatpush.bf16.msra.mxu0 %v783
    %1088 = vmatpush.bf16.msra.mxu0 %v779
    %1089 = vmatpush.bf16.msra.mxu0 %v775
    %1090 = vmatmul.bf16.gmra.mxu0 %v248
    %v1091 = vpop.f32.mrf.mxu0
    %v1092 = vadd.f32 %v383, %v1091
    %v1093 = vpop.f32.mrf.mxu0
    %1094 = vdwg.mxu0
    %1095 = vmatpush.bf16.msra.mxu0 %v835
    %1096 = vmatpush.bf16.msra.mxu0 %v831
    %1097 = vmatpush.bf16.msra.mxu0 %v827
    %1098 = vmatpush.bf16.msra.mxu0 %v823
    %1099 = vmatpush.bf16.msra.mxu0 %v819
    %1100 = vmatpush.bf16.msra.mxu0 %v815
    %1101 = vmatpush.bf16.msra.mxu0 %v811
    %1102 = vmatpush.bf16.msra.mxu0 %v807
    %1103 = vmatmul.bf16.gmra.mxu0 %v249
    %v1104 = vpop.f32.mrf.mxu0
    %v1105 = vadd.f32 %v1092, %v1104
    %v1106 = vpop.f32.mrf.mxu0
    %1107 = vdwg.mxu0
    %1108 = vmatpush.bf16.msra.mxu0 %v867
    %1109 = vmatpush.bf16.msra.mxu0 %v863
    %1110 = vmatpush.bf16.msra.mxu0 %v859
    %1111 = vmatpush.bf16.msra.mxu0 %v855
    %1112 = vmatpush.bf16.msra.mxu0 %v851
    %1113 = vmatpush.bf16.msra.mxu0 %v847
    %1114 = vmatpush.bf16.msra.mxu0 %v843
    %1115 = vmatpush.bf16.msra.mxu0 %v839
    %1116 = vmatmul.bf16.gmra.mxu0 %v250
    %v1117 = vpop.f32.mrf.mxu0
    %v1118 = vadd.f32 %v1105, %v1117
    %v1119 = vpop.f32.mrf.mxu0
    %1120 = vdwg.mxu0
    %1121 = vmatpush.bf16.msra.mxu0 %v899
    %1122 = vmatpush.bf16.msra.mxu0 %v895
    %1123 = vmatpush.bf16.msra.mxu0 %v891
    %1124 = vmatpush.bf16.msra.mxu0 %v887
    %1125 = vmatpush.bf16.msra.mxu0 %v883
    %1126 = vmatpush.bf16.msra.mxu0 %v879
    %1127 = vmatpush.bf16.msra.mxu0 %v875
    %1128 = vmatpush.bf16.msra.mxu0 %v871
    %1129 = vmatmul.bf16.gmra.mxu0 %v251
    %v1130 = vpop.f32.mrf.mxu0
    %v1131 = vadd.f32 %v1118, %v1130
    %v1132 = vpop.f32.mrf.mxu0
    %1133 = vdwg.mxu0
    %1134 = vmatpush.bf16.msra.mxu0 %v804
    %1135 = vmatpush.bf16.msra.mxu0 %v800
    %1136 = vmatpush.bf16.msra.mxu0 %v796
    %1137 = vmatpush.bf16.msra.mxu0 %v792
    %1138 = vmatpush.bf16.msra.mxu0 %v788
    %1139 = vmatpush.bf16.msra.mxu0 %v784
    %1140 = vmatpush.bf16.msra.mxu0 %v780
    %1141 = vmatpush.bf16.msra.mxu0 %v776
    %1142 = vmatmul.bf16.gmra.mxu0 %v248
    %v1143 = vpop.f32.mrf.mxu0
    %v1144 = vadd.f32 %v384, %v1143
    %v1145 = vpop.f32.mrf.mxu0
    %1146 = vdwg.mxu0
    %1147 = vmatpush.bf16.msra.mxu0 %v836
    %1148 = vmatpush.bf16.msra.mxu0 %v832
    %1149 = vmatpush.bf16.msra.mxu0 %v828
    %1150 = vmatpush.bf16.msra.mxu0 %v824
    %1151 = vmatpush.bf16.msra.mxu0 %v820
    %1152 = vmatpush.bf16.msra.mxu0 %v816
    %1153 = vmatpush.bf16.msra.mxu0 %v812
    %1154 = vmatpush.bf16.msra.mxu0 %v808
    %1155 = vmatmul.bf16.gmra.mxu0 %v249
    %v1156 = vpop.f32.mrf.mxu0
    %v1157 = vadd.f32 %v1144, %v1156
    %v1158 = vpop.f32.mrf.mxu0
    %1159 = vdwg.mxu0
    %1160 = vmatpush.bf16.msra.mxu0 %v868
    %1161 = vmatpush.bf16.msra.mxu0 %v864
    %1162 = vmatpush.bf16.msra.mxu0 %v860
    %1163 = vmatpush.bf16.msra.mxu0 %v856
    %1164 = vmatpush.bf16.msra.mxu0 %v852
    %1165 = vmatpush.bf16.msra.mxu0 %v848
    %1166 = vmatpush.bf16.msra.mxu0 %v844
    %1167 = vmatpush.bf16.msra.mxu0 %v840
    %1168 = vmatmul.bf16.gmra.mxu0 %v250
    %v1169 = vpop.f32.mrf.mxu0
    %v1170 = vadd.f32 %v1157, %v1169
    %v1171 = vpop.f32.mrf.mxu0
    %1172 = vdwg.mxu0
    %1173 = vmatpush.bf16.msra.mxu0 %v900
    %1174 = vmatpush.bf16.msra.mxu0 %v896
    %1175 = vmatpush.bf16.msra.mxu0 %v892
    %1176 = vmatpush.bf16.msra.mxu0 %v888
    %1177 = vmatpush.bf16.msra.mxu0 %v884
    %1178 = vmatpush.bf16.msra.mxu0 %v880
    %1179 = vmatpush.bf16.msra.mxu0 %v876
    %1180 = vmatpush.bf16.msra.mxu0 %v872
    %1181 = vmatmul.bf16.gmra.mxu0 %v251
    %v1182 = vpop.f32.mrf.mxu0
    %v1183 = vadd.f32 %v1170, %v1182
    %v1184 = vpop.f32.mrf.mxu0
    %1185 = vdwg.mxu0
    %1186 = vmatpush.bf16.msra.mxu0 %v805
    %1187 = vmatpush.bf16.msra.mxu0 %v801
    %1188 = vmatpush.bf16.msra.mxu0 %v797
    %1189 = vmatpush.bf16.msra.mxu0 %v793
    %1190 = vmatpush.bf16.msra.mxu0 %v789
    %1191 = vmatpush.bf16.msra.mxu0 %v785
    %1192 = vmatpush.bf16.msra.mxu0 %v781
    %1193 = vmatpush.bf16.msra.mxu0 %v777
    %1194 = vmatmul.bf16.gmra.mxu0 %v248
    %v1195 = vpop.f32.mrf.mxu0
    %v1196 = vadd.f32 %v385, %v1195
    %v1197 = vpop.f32.mrf.mxu0
    %1198 = vdwg.mxu0
    %1199 = vmatpush.bf16.msra.mxu0 %v837
    %1200 = vmatpush.bf16.msra.mxu0 %v833
    %1201 = vmatpush.bf16.msra.mxu0 %v829
    %1202 = vmatpush.bf16.msra.mxu0 %v825
    %1203 = vmatpush.bf16.msra.mxu0 %v821
    %1204 = vmatpush.bf16.msra.mxu0 %v817
    %1205 = vmatpush.bf16.msra.mxu0 %v813
    %1206 = vmatpush.bf16.msra.mxu0 %v809
    %1207 = vmatmul.bf16.gmra.mxu0 %v249
    %v1208 = vpop.f32.mrf.mxu0
    %v1209 = vadd.f32 %v1196, %v1208
    %v1210 = vpop.f32.mrf.mxu0
    %1211 = vdwg.mxu0
    %1212 = vmatpush.bf16.msra.mxu0 %v869
    %1213 = vmatpush.bf16.msra.mxu0 %v865
    %1214 = vmatpush.bf16.msra.mxu0 %v861
    %1215 = vmatpush.bf16.msra.mxu0 %v857
    %1216 = vmatpush.bf16.msra.mxu0 %v853
    %1217 = vmatpush.bf16.msra.mxu0 %v849
    %1218 = vmatpush.bf16.msra.mxu0 %v845
    %1219 = vmatpush.bf16.msra.mxu0 %v841
    %1220 = vmatmul.bf16.gmra.mxu0 %v250
    %v1221 = vpop.f32.mrf.mxu0
    %v1222 = vadd.f32 %v1209, %v1221
    %v1223 = vpop.f32.mrf.mxu0
    %1224 = vdwg.mxu0
    %1225 = vmatpush.bf16.msra.mxu0 %v901
    %1226 = vmatpush.bf16.msra.mxu0 %v897
    %1227 = vmatpush.bf16.msra.mxu0 %v893
    %1228 = vmatpush.bf16.msra.mxu0 %v889
    %1229 = vmatpush.bf16.msra.mxu0 %v885
    %1230 = vmatpush.bf16.msra.mxu0 %v881
    %1231 = vmatpush.bf16.msra.mxu0 %v877
    %1232 = vmatpush.bf16.msra.mxu0 %v873
    %1233 = vmatmul.bf16.gmra.mxu0 %v251
    %v1234 = vpop.f32.mrf.mxu0
    %v1235 = vadd.f32 %v1222, %v1234
    %v1236 = vpop.f32.mrf.mxu0
    %1237 = vdwg.mxu0
    %v1238 = vtanh.pop %v1079
    %v1239 = vtanh.pop %v1131
    %v1240 = vtanh.pop %v1183
    %v1241 = vtanh.pop %v1235
    %v1242 = vpack.c.bf16 %v1238, %v1238
    %v1243 = vpack.c.bf16 %v1239, %v1239
    %v1244 = vpack.c.bf16 %v1240, %v1240
    %v1245 = vpack.c.bf16 %v1241, %v1241
    %v1246 = vld [vmem:[#allocation11] sm:$0xff]
    %v1247 = vld [vmem:[#allocation11 + $0x8] sm:$0xff]
    %v1248 = vld [vmem:[#allocation11 + $0x10] sm:$0xff]
    %v1249 = vld [vmem:[#allocation11 + $0x18] sm:$0xf]
    %v1250 = vld [vmem:[#allocation11 + $0x1c] sm:$0xff]
    %v1251 = vld [vmem:[#allocation11 + $0x24] sm:$0xff]
    %v1252 = vld [vmem:[#allocation11 + $0x2c] sm:$0xff]
    %v1253 = vld [vmem:[#allocation11 + $0x34] sm:$0xf]
    %v1254 = vld [vmem:[#allocation11 + $0x38] sm:$0xff]
    %v1255 = vld [vmem:[#allocation11 + $0x40] sm:$0xff]
    %v1256 = vld [vmem:[#allocation11 + $0x48] sm:$0xff]
    %v1257 = vld [vmem:[#allocation11 + $0x50] sm:$0xf]
    %v1258 = vld [vmem:[#allocation11 + $0x54] sm:$0xff]
    %v1259 = vld [vmem:[#allocation11 + $0x5c] sm:$0xff]
    %v1260 = vld [vmem:[#allocation11 + $0x64] sm:$0xff]
    %v1261 = vld [vmem:[#allocation11 + $0x6c] sm:$0xf]
    %v1262 = vld [vmem:[#allocation11 + $0x70] sm:$0xff]
    %v1263 = vld [vmem:[#allocation11 + $0x78] sm:$0xff]
    %v1264 = vld [vmem:[#allocation11 + $0x80] sm:$0xff]
    %v1265 = vld [vmem:[#allocation11 + $0x88] sm:$0xf]
    %v1266 = vld [vmem:[#allocation11 + $0x8c] sm:$0xff]
    %v1267 = vld [vmem:[#allocation11 + $0x94] sm:$0xff]
    %v1268 = vld [vmem:[#allocation11 + $0x9c] sm:$0xff]
    %v1269 = vld [vmem:[#allocation11 + $0xa4] sm:$0xf]
    %v1270 = vld [vmem:[#allocation11 + $0xa8] sm:$0xff]
    %v1271 = vld [vmem:[#allocation11 + $0xb0] sm:$0xff]
    %v1272 = vld [vmem:[#allocation11 + $0xb8] sm:$0xff]
    %v1273 = vld [vmem:[#allocation11 + $0xc0] sm:$0xf]
    %v1274 = vld [vmem:[#allocation11 + $0xc4] sm:$0xff]
    %v1275 = vld [vmem:[#allocation11 + $0xcc] sm:$0xff]
    %v1276 = vld [vmem:[#allocation11 + $0xd4] sm:$0xff]
    %v1277 = vld [vmem:[#allocation11 + $0xdc] sm:$0xf]
    %v1278 = vld [vmem:[#allocation11 + $0xe0] sm:$0xff]
    %v1279 = vld [vmem:[#allocation11 + $0xe8] sm:$0xff]
    %v1280 = vld [vmem:[#allocation11 + $0xf0] sm:$0xff]
    %v1281 = vld [vmem:[#allocation11 + $0xf8] sm:$0xf]
    %v1282 = vld [vmem:[#allocation11 + $0xfc] sm:$0xff]
    %v1283 = vld [vmem:[#allocation11 + $0x104] sm:$0xff]
    %v1284 = vld [vmem:[#allocation11 + $0x10c] sm:$0xff]
    %v1285 = vld [vmem:[#allocation11 + $0x114] sm:$0xf]
    %v1286 = vld [vmem:[#allocation11 + $0x118] sm:$0xff]
    %v1287 = vld [vmem:[#allocation11 + $0x120] sm:$0xff]
    %v1288 = vld [vmem:[#allocation11 + $0x128] sm:$0xff]
    %v1289 = vld [vmem:[#allocation11 + $0x130] sm:$0xf]
    %v1290 = vld [vmem:[#allocation11 + $0x134] sm:$0xff]
    %v1291 = vld [vmem:[#allocation11 + $0x13c] sm:$0xff]
    %v1292 = vld [vmem:[#allocation11 + $0x144] sm:$0xff]
    %v1293 = vld [vmem:[#allocation11 + $0x14c] sm:$0xf]
    %v1294 = vld [vmem:[#allocation11 + $0x150] sm:$0xff]
    %v1295 = vld [vmem:[#allocation11 + $0x158] sm:$0xff]
    %v1296 = vld [vmem:[#allocation11 + $0x160] sm:$0xff]
    %v1297 = vld [vmem:[#allocation11 + $0x168] sm:$0xf]
    %v1298 = vld [vmem:[#allocation11 + $0x16c] sm:$0xff]
    %v1299 = vld [vmem:[#allocation11 + $0x174] sm:$0xff]
    %v1300 = vld [vmem:[#allocation11 + $0x17c] sm:$0xff]
    %v1301 = vld [vmem:[#allocation11 + $0x184] sm:$0xf]
    %v1302 = vld [vmem:[#allocation11 + $0x188] sm:$0xff]
    %v1303 = vld [vmem:[#allocation11 + $0x190] sm:$0xff]
    %v1304 = vld [vmem:[#allocation11 + $0x198] sm:$0xff]
    %v1305 = vld [vmem:[#allocation11 + $0x1a0] sm:$0xf]
    %v1306 = vld [vmem:[#allocation11 + $0x1a4] sm:$0xff]
    %v1307 = vld [vmem:[#allocation11 + $0x1ac] sm:$0xff]
    %v1308 = vld [vmem:[#allocation11 + $0x1b4] sm:$0xff]
    %v1309 = vld [vmem:[#allocation11 + $0x1bc] sm:$0xf]
    %v1310 = vld [vmem:[#allocation11 + $0x1c0] sm:$0xff]
    %v1311 = vld [vmem:[#allocation11 + $0x1c8] sm:$0xff]
    %v1312 = vld [vmem:[#allocation11 + $0x1d0] sm:$0xff]
    %v1313 = vld [vmem:[#allocation11 + $0x1d8] sm:$0xf]
    %v1314 = vld [vmem:[#allocation11 + $0x1dc] sm:$0xff]
    %v1315 = vld [vmem:[#allocation11 + $0x1e4] sm:$0xff]
    %v1316 = vld [vmem:[#allocation11 + $0x1ec] sm:$0xff]
    %v1317 = vld [vmem:[#allocation11 + $0x1f4] sm:$0xf]
    %v1318 = vld [vmem:[#allocation11 + $0x1f8] sm:$0xff]
    %v1319 = vld [vmem:[#allocation11 + $0x200] sm:$0xff]
    %v1320 = vld [vmem:[#allocation11 + $0x208] sm:$0xff]
    %v1321 = vld [vmem:[#allocation11 + $0x210] sm:$0xf]
    %v1322 = vld [vmem:[#allocation11 + $0x214] sm:$0xff]
    %v1323 = vld [vmem:[#allocation11 + $0x21c] sm:$0xff]
    %v1324 = vld [vmem:[#allocation11 + $0x224] sm:$0xff]
    %v1325 = vld [vmem:[#allocation11 + $0x22c] sm:$0xf]
    %v1326 = vld [vmem:[#allocation11 + $0x230] sm:$0xff]
    %v1327 = vld [vmem:[#allocation11 + $0x238] sm:$0xff]
    %v1328 = vld [vmem:[#allocation11 + $0x240] sm:$0xff]
    %v1329 = vld [vmem:[#allocation11 + $0x248] sm:$0xf]
    %v1330 = vld [vmem:[#allocation11 + $0x24c] sm:$0xff]
    %v1331 = vld [vmem:[#allocation11 + $0x254] sm:$0xff]
    %v1332 = vld [vmem:[#allocation11 + $0x25c] sm:$0xff]
    %v1333 = vld [vmem:[#allocation11 + $0x264] sm:$0xf]
    %v1334 = vld [vmem:[#allocation11 + $0x268] sm:$0xff]
    %v1335 = vld [vmem:[#allocation11 + $0x270] sm:$0xff]
    %v1336 = vld [vmem:[#allocation11 + $0x278] sm:$0xff]
    %v1337 = vld [vmem:[#allocation11 + $0x280] sm:$0xf]
    %v1338 = vld [vmem:[#allocation11 + $0x284] sm:$0xff]
    %v1339 = vld [vmem:[#allocation11 + $0x28c] sm:$0xff]
    %v1340 = vld [vmem:[#allocation11 + $0x294] sm:$0xff]
    %v1341 = vld [vmem:[#allocation11 + $0x29c] sm:$0xf]
    %v1342 = vld [vmem:[#allocation11 + $0x2a0] sm:$0xff]
    %v1343 = vld [vmem:[#allocation11 + $0x2a8] sm:$0xff]
    %v1344 = vld [vmem:[#allocation11 + $0x2b0] sm:$0xff]
    %v1345 = vld [vmem:[#allocation11 + $0x2b8] sm:$0xf]
    %v1346 = vld [vmem:[#allocation11 + $0x2bc] sm:$0xff]
    %v1347 = vld [vmem:[#allocation11 + $0x2c4] sm:$0xff]
    %v1348 = vld [vmem:[#allocation11 + $0x2cc] sm:$0xff]
    %v1349 = vld [vmem:[#allocation11 + $0x2d4] sm:$0xf]
    %v1350 = vld [vmem:[#allocation11 + $0x2d8] sm:$0xff]
    %v1351 = vld [vmem:[#allocation11 + $0x2e0] sm:$0xff]
    %v1352 = vld [vmem:[#allocation11 + $0x2e8] sm:$0xff]
    %v1353 = vld [vmem:[#allocation11 + $0x2f0] sm:$0xf]
    %v1354 = vld [vmem:[#allocation11 + $0x2f4] sm:$0xff]
    %v1355 = vld [vmem:[#allocation11 + $0x2fc] sm:$0xff]
    %v1356 = vld [vmem:[#allocation11 + $0x304] sm:$0xff]
    %v1357 = vld [vmem:[#allocation11 + $0x30c] sm:$0xf]
    %v1358 = vld [vmem:[#allocation11 + $0x310] sm:$0xff]
    %v1359 = vld [vmem:[#allocation11 + $0x318] sm:$0xff]
    %v1360 = vld [vmem:[#allocation11 + $0x320] sm:$0xff]
    %v1361 = vld [vmem:[#allocation11 + $0x328] sm:$0xf]
    %v1362 = vld [vmem:[#allocation11 + $0x32c] sm:$0xff]
    %v1363 = vld [vmem:[#allocation11 + $0x334] sm:$0xff]
    %v1364 = vld [vmem:[#allocation11 + $0x33c] sm:$0xff]
    %v1365 = vld [vmem:[#allocation11 + $0x344] sm:$0xf]
    %v1366 = vld [vmem:[#allocation11 + $0x348] sm:$0xff]
    %v1367 = vld [vmem:[#allocation11 + $0x350] sm:$0xff]
    %v1368 = vld [vmem:[#allocation11 + $0x358] sm:$0xff]
    %v1369 = vld [vmem:[#allocation11 + $0x360] sm:$0xf]
    %v1370 = vld [vmem:[#allocation11 + $0x364] sm:$0xff]
    %v1371 = vld [vmem:[#allocation11 + $0x36c] sm:$0xff]
    %v1372 = vld [vmem:[#allocation11 + $0x374] sm:$0xff]
    %v1373 = vld [vmem:[#allocation11 + $0x37c] sm:$0xf]
    %v1374 = vld [vmem:[#allocation11 + $0x380] sm:$0xff]
    %v1375 = vld [vmem:[#allocation11 + $0x388] sm:$0xff]
    %v1376 = vld [vmem:[#allocation11 + $0x390] sm:$0xff]
    %v1377 = vld [vmem:[#allocation11 + $0x398] sm:$0xf]
    %v1378 = vld [vmem:[#allocation11 + $0x39c] sm:$0xff]
    %v1379 = vld [vmem:[#allocation11 + $0x3a4] sm:$0xff]
    %v1380 = vld [vmem:[#allocation11 + $0x3ac] sm:$0xff]
    %v1381 = vld [vmem:[#allocation11 + $0x3b4] sm:$0xf]
    %v1382 = vld [vmem:[#allocation11 + $0x3b8] sm:$0xff]
    %v1383 = vld [vmem:[#allocation11 + $0x3c0] sm:$0xff]
    %v1384 = vld [vmem:[#allocation11 + $0x3c8] sm:$0xff]
    %v1385 = vld [vmem:[#allocation11 + $0x3d0] sm:$0xf]
    %v1386 = vld [vmem:[#allocation11 + $0x3d4] sm:$0xff]
    %v1387 = vld [vmem:[#allocation11 + $0x3dc] sm:$0xff]
    %v1388 = vld [vmem:[#allocation11 + $0x3e4] sm:$0xff]
    %v1389 = vld [vmem:[#allocation11 + $0x3ec] sm:$0xf]
    %v1390 = vld [vmem:[#allocation11 + $0x3f0] sm:$0xff]
    %v1391 = vld [vmem:[#allocation11 + $0x3f8] sm:$0xff]
    %v1392 = vld [vmem:[#allocation11 + $0x400] sm:$0xff]
    %v1393 = vld [vmem:[#allocation11 + $0x408] sm:$0xf]
    %v1394 = vld [vmem:[#allocation11 + $0x40c] sm:$0xff]
    %v1395 = vld [vmem:[#allocation11 + $0x414] sm:$0xff]
    %v1396 = vld [vmem:[#allocation11 + $0x41c] sm:$0xff]
    %v1397 = vld [vmem:[#allocation11 + $0x424] sm:$0xf]
    %v1398 = vld [vmem:[#allocation11 + $0x428] sm:$0xff]
    %v1399 = vld [vmem:[#allocation11 + $0x430] sm:$0xff]
    %v1400 = vld [vmem:[#allocation11 + $0x438] sm:$0xff]
    %v1401 = vld [vmem:[#allocation11 + $0x440] sm:$0xf]
    %v1402 = vld [vmem:[#allocation11 + $0x444] sm:$0xff]
    %v1403 = vld [vmem:[#allocation11 + $0x44c] sm:$0xff]
    %v1404 = vld [vmem:[#allocation11 + $0x454] sm:$0xff]
    %v1405 = vld [vmem:[#allocation11 + $0x45c] sm:$0xf]
    %v1406 = vld [vmem:[#allocation11 + $0x460] sm:$0xff]
    %v1407 = vld [vmem:[#allocation11 + $0x468] sm:$0xff]
    %v1408 = vld [vmem:[#allocation11 + $0x470] sm:$0xff]
    %v1409 = vld [vmem:[#allocation11 + $0x478] sm:$0xf]
    %v1410 = vld [vmem:[#allocation11 + $0x47c] sm:$0xff]
    %v1411 = vld [vmem:[#allocation11 + $0x484] sm:$0xff]
    %v1412 = vld [vmem:[#allocation11 + $0x48c] sm:$0xff]
    %v1413 = vld [vmem:[#allocation11 + $0x494] sm:$0xf]
    %v1414 = vld [vmem:[#allocation11 + $0x498] sm:$0xff]
    %v1415 = vld [vmem:[#allocation11 + $0x4a0] sm:$0xff]
    %v1416 = vld [vmem:[#allocation11 + $0x4a8] sm:$0xff]
    %v1417 = vld [vmem:[#allocation11 + $0x4b0] sm:$0xf]
    %v1418 = vld [vmem:[#allocation11 + $0x4b4] sm:$0xff]
    %v1419 = vld [vmem:[#allocation11 + $0x4bc] sm:$0xff]
    %v1420 = vld [vmem:[#allocation11 + $0x4c4] sm:$0xff]
    %v1421 = vld [vmem:[#allocation11 + $0x4cc] sm:$0xf]
    %v1422 = vld [vmem:[#allocation11 + $0x4d0] sm:$0xff]
    %v1423 = vld [vmem:[#allocation11 + $0x4d8] sm:$0xff]
    %v1424 = vld [vmem:[#allocation11 + $0x4e0] sm:$0xff]
    %v1425 = vld [vmem:[#allocation11 + $0x4e8] sm:$0xf]
    %v1426 = vld [vmem:[#allocation11 + $0x4ec] sm:$0xff]
    %v1427 = vld [vmem:[#allocation11 + $0x4f4] sm:$0xff]
    %v1428 = vld [vmem:[#allocation11 + $0x4fc] sm:$0xff]
    %v1429 = vld [vmem:[#allocation11 + $0x504] sm:$0xf]
    %v1430 = vld [vmem:[#allocation11 + $0x508] sm:$0xff]
    %v1431 = vld [vmem:[#allocation11 + $0x510] sm:$0xff]
    %v1432 = vld [vmem:[#allocation11 + $0x518] sm:$0xff]
    %v1433 = vld [vmem:[#allocation11 + $0x520] sm:$0xf]
    %v1434 = vld [vmem:[#allocation11 + $0x524] sm:$0xff]
    %v1435 = vld [vmem:[#allocation11 + $0x52c] sm:$0xff]
    %v1436 = vld [vmem:[#allocation11 + $0x534] sm:$0xff]
    %v1437 = vld [vmem:[#allocation11 + $0x53c] sm:$0xf]
    %v1438 = vld [vmem:[#allocation11 + $0x540] sm:$0xff]
    %v1439 = vld [vmem:[#allocation11 + $0x548] sm:$0xff]
    %v1440 = vld [vmem:[#allocation11 + $0x550] sm:$0xff]
    %v1441 = vld [vmem:[#allocation11 + $0x558] sm:$0xf]
    %v1442 = vld [vmem:[#allocation11 + $0x55c] sm:$0xff]
    %v1443 = vld [vmem:[#allocation11 + $0x564] sm:$0xff]
    %v1444 = vld [vmem:[#allocation11 + $0x56c] sm:$0xff]
    %v1445 = vld [vmem:[#allocation11 + $0x574] sm:$0xf]
    %v1446 = vld [vmem:[#allocation11 + $0x578] sm:$0xff]
    %v1447 = vld [vmem:[#allocation11 + $0x580] sm:$0xff]
    %v1448 = vld [vmem:[#allocation11 + $0x588] sm:$0xff]
    %v1449 = vld [vmem:[#allocation11 + $0x590] sm:$0xf]
    %v1450 = vld [vmem:[#allocation11 + $0x594] sm:$0xff]
    %v1451 = vld [vmem:[#allocation11 + $0x59c] sm:$0xff]
    %v1452 = vld [vmem:[#allocation11 + $0x5a4] sm:$0xff]
    %v1453 = vld [vmem:[#allocation11 + $0x5ac] sm:$0xf]
    %v1454 = vld [vmem:[#allocation11 + $0x5b0] sm:$0xff]
    %v1455 = vld [vmem:[#allocation11 + $0x5b8] sm:$0xff]
    %v1456 = vld [vmem:[#allocation11 + $0x5c0] sm:$0xff]
    %v1457 = vld [vmem:[#allocation11 + $0x5c8] sm:$0xf]
    %v1458 = vld [vmem:[#allocation11 + $0x5cc] sm:$0xff]
    %v1459 = vld [vmem:[#allocation11 + $0x5d4] sm:$0xff]
    %v1460 = vld [vmem:[#allocation11 + $0x5dc] sm:$0xff]
    %v1461 = vld [vmem:[#allocation11 + $0x5e4] sm:$0xf]
    %v1462 = vld [vmem:[#allocation11 + $0x5e8] sm:$0xff]
    %v1463 = vld [vmem:[#allocation11 + $0x5f0] sm:$0xff]
    %v1464 = vld [vmem:[#allocation11 + $0x5f8] sm:$0xff]
    %v1465 = vld [vmem:[#allocation11 + $0x600] sm:$0xf]
    %v1466 = vld [vmem:[#allocation11 + $0x604] sm:$0xff]
    %v1467 = vld [vmem:[#allocation11 + $0x60c] sm:$0xff]
    %v1468 = vld [vmem:[#allocation11 + $0x614] sm:$0xff]
    %v1469 = vld [vmem:[#allocation11 + $0x61c] sm:$0xf]
    %v1470 = vld [vmem:[#allocation11 + $0x620] sm:$0xff]
    %v1471 = vld [vmem:[#allocation11 + $0x628] sm:$0xff]
    %v1472 = vld [vmem:[#allocation11 + $0x630] sm:$0xff]
    %v1473 = vld [vmem:[#allocation11 + $0x638] sm:$0xf]
    %v1474 = vld [vmem:[#allocation11 + $0x63c] sm:$0xff]
    %v1475 = vld [vmem:[#allocation11 + $0x644] sm:$0xff]
    %v1476 = vld [vmem:[#allocation11 + $0x64c] sm:$0xff]
    %v1477 = vld [vmem:[#allocation11 + $0x654] sm:$0xf]
    %v1478 = vld [vmem:[#allocation11 + $0x658] sm:$0xff]
    %v1479 = vld [vmem:[#allocation11 + $0x660] sm:$0xff]
    %v1480 = vld [vmem:[#allocation11 + $0x668] sm:$0xff]
    %v1481 = vld [vmem:[#allocation11 + $0x670] sm:$0xf]
    %v1482 = vld [vmem:[#allocation11 + $0x674] sm:$0xff]
    %v1483 = vld [vmem:[#allocation11 + $0x67c] sm:$0xff]
    %v1484 = vld [vmem:[#allocation11 + $0x684] sm:$0xff]
    %v1485 = vld [vmem:[#allocation11 + $0x68c] sm:$0xf]
    %v1486 = vld [vmem:[#allocation11 + $0x690] sm:$0xff]
    %v1487 = vld [vmem:[#allocation11 + $0x698] sm:$0xff]
    %v1488 = vld [vmem:[#allocation11 + $0x6a0] sm:$0xff]
    %v1489 = vld [vmem:[#allocation11 + $0x6a8] sm:$0xf]
    %v1490 = vld [vmem:[#allocation11 + $0x6ac] sm:$0xff]
    %v1491 = vld [vmem:[#allocation11 + $0x6b4] sm:$0xff]
    %v1492 = vld [vmem:[#allocation11 + $0x6bc] sm:$0xff]
    %v1493 = vld [vmem:[#allocation11 + $0x6c4] sm:$0xf]
    %v1494 = vld [vmem:[#allocation11 + $0x6c8] sm:$0xff]
    %v1495 = vld [vmem:[#allocation11 + $0x6d0] sm:$0xff]
    %v1496 = vld [vmem:[#allocation11 + $0x6d8] sm:$0xff]
    %v1497 = vld [vmem:[#allocation11 + $0x6e0] sm:$0xf]
    %v1498 = vld [vmem:[#allocation11 + $0x6e4] sm:$0xff]
    %v1499 = vld [vmem:[#allocation11 + $0x6ec] sm:$0xff]
    %v1500 = vld [vmem:[#allocation11 + $0x6f4] sm:$0xff]
    %v1501 = vld [vmem:[#allocation11 + $0x6fc] sm:$0xf]
    %v1502 = vld [vmem:[#allocation13] sm:$0xff]
    %v1504 = vperm.slane %v1502, 0
    %v1505 = vperm.slane %v1502, 1
    %v1506 = vperm.slane %v1502, 2
    %v1507 = vperm.slane %v1502, 3
    %v1508 = vperm.slane %v1502, 4
    %v1509 = vperm.slane %v1502, 5
    %v1510 = vperm.slane %v1502, 6
    %v1774 = vunpack.c.l.b16 %v1246
    %v1775 = vunpack.c.h.b16 %v1246
    %v1776 = vunpack.c.l.b16 %v1247
    %v1777 = vunpack.c.h.b16 %v1247
    %v1778 = vunpack.c.l.b16 %v1248
    %v1779 = vunpack.c.h.b16 %v1248
    %v1780 = vunpack.c.l.b16 %v1249
    %v1781 = vunpack.c.l.b16 %v1250
    %v1782 = vunpack.c.h.b16 %v1250
    %v1783 = vunpack.c.l.b16 %v1251
    %v1784 = vunpack.c.h.b16 %v1251
    %v1785 = vunpack.c.l.b16 %v1252
    %v1786 = vunpack.c.h.b16 %v1252
    %v1787 = vunpack.c.l.b16 %v1253
    %v1788 = vunpack.c.l.b16 %v1254
    %v1789 = vunpack.c.h.b16 %v1254
    %v1790 = vunpack.c.l.b16 %v1255
    %v1791 = vunpack.c.h.b16 %v1255
    %v1792 = vunpack.c.l.b16 %v1256
    %v1793 = vunpack.c.h.b16 %v1256
    %v1794 = vunpack.c.l.b16 %v1257
    %v1795 = vunpack.c.l.b16 %v1258
    %v1796 = vunpack.c.h.b16 %v1258
    %v1797 = vunpack.c.l.b16 %v1259
    %v1798 = vunpack.c.h.b16 %v1259
    %v1799 = vunpack.c.l.b16 %v1260
    %v1800 = vunpack.c.h.b16 %v1260
    %v1801 = vunpack.c.l.b16 %v1261
    %v1802 = vunpack.c.l.b16 %v1262
    %v1803 = vunpack.c.h.b16 %v1262
    %v1804 = vunpack.c.l.b16 %v1263
    %v1805 = vunpack.c.h.b16 %v1263
    %v1806 = vunpack.c.l.b16 %v1264
    %v1807 = vunpack.c.h.b16 %v1264
    %v1808 = vunpack.c.l.b16 %v1265
    %v1809 = vunpack.c.l.b16 %v1266
    %v1810 = vunpack.c.h.b16 %v1266
    %v1811 = vunpack.c.l.b16 %v1267
    %v1812 = vunpack.c.h.b16 %v1267
    %v1813 = vunpack.c.l.b16 %v1268
    %v1814 = vunpack.c.h.b16 %v1268
    %v1815 = vunpack.c.l.b16 %v1269
    %v1816 = vunpack.c.l.b16 %v1270
    %v1817 = vunpack.c.h.b16 %v1270
    %v1818 = vunpack.c.l.b16 %v1271
    %v1819 = vunpack.c.h.b16 %v1271
    %v1820 = vunpack.c.l.b16 %v1272
    %v1821 = vunpack.c.h.b16 %v1272
    %v1822 = vunpack.c.l.b16 %v1273
    %v1823 = vunpack.c.l.b16 %v1274
    %v1824 = vunpack.c.h.b16 %v1274
    %v1825 = vunpack.c.l.b16 %v1275
    %v1826 = vunpack.c.h.b16 %v1275
    %v1827 = vunpack.c.l.b16 %v1276
    %v1828 = vunpack.c.h.b16 %v1276
    %v1829 = vunpack.c.l.b16 %v1277
    %v1830 = vunpack.c.l.b16 %v1278
    %v1831 = vunpack.c.h.b16 %v1278
    %v1832 = vunpack.c.l.b16 %v1279
    %v1833 = vunpack.c.h.b16 %v1279
    %v1834 = vunpack.c.l.b16 %v1280
    %v1835 = vunpack.c.h.b16 %v1280
    %v1836 = vunpack.c.l.b16 %v1281
    %v1837 = vunpack.c.l.b16 %v1282
    %v1838 = vunpack.c.h.b16 %v1282
    %v1839 = vunpack.c.l.b16 %v1283
    %v1840 = vunpack.c.h.b16 %v1283
    %v1841 = vunpack.c.l.b16 %v1284
    %v1842 = vunpack.c.h.b16 %v1284
    %v1843 = vunpack.c.l.b16 %v1285
    %v1844 = vunpack.c.l.b16 %v1286
    %v1845 = vunpack.c.h.b16 %v1286
    %v1846 = vunpack.c.l.b16 %v1287
    %v1847 = vunpack.c.h.b16 %v1287
    %v1848 = vunpack.c.l.b16 %v1288
    %v1849 = vunpack.c.h.b16 %v1288
    %v1850 = vunpack.c.l.b16 %v1289
    %v1851 = vunpack.c.l.b16 %v1290
    %v1852 = vunpack.c.h.b16 %v1290
    %v1853 = vunpack.c.l.b16 %v1291
    %v1854 = vunpack.c.h.b16 %v1291
    %v1855 = vunpack.c.l.b16 %v1292
    %v1856 = vunpack.c.h.b16 %v1292
    %v1857 = vunpack.c.l.b16 %v1293
    %v1858 = vunpack.c.l.b16 %v1294
    %v1859 = vunpack.c.h.b16 %v1294
    %v1860 = vunpack.c.l.b16 %v1295
    %v1861 = vunpack.c.h.b16 %v1295
    %v1862 = vunpack.c.l.b16 %v1296
    %v1863 = vunpack.c.h.b16 %v1296
    %v1864 = vunpack.c.l.b16 %v1297
    %v1865 = vunpack.c.l.b16 %v1298
    %v1866 = vunpack.c.h.b16 %v1298
    %v1867 = vunpack.c.l.b16 %v1299
    %v1868 = vunpack.c.h.b16 %v1299
    %v1869 = vunpack.c.l.b16 %v1300
    %v1870 = vunpack.c.h.b16 %v1300
    %v1871 = vunpack.c.l.b16 %v1301
    %v1872 = vunpack.c.l.b16 %v1302
    %v1873 = vunpack.c.h.b16 %v1302
    %v1874 = vunpack.c.l.b16 %v1303
    %v1875 = vunpack.c.h.b16 %v1303
    %v1876 = vunpack.c.l.b16 %v1304
    %v1877 = vunpack.c.h.b16 %v1304
    %v1878 = vunpack.c.l.b16 %v1305
    %v1879 = vunpack.c.l.b16 %v1306
    %v1880 = vunpack.c.h.b16 %v1306
    %v1881 = vunpack.c.l.b16 %v1307
    %v1882 = vunpack.c.h.b16 %v1307
    %v1883 = vunpack.c.l.b16 %v1308
    %v1884 = vunpack.c.h.b16 %v1308
    %v1885 = vunpack.c.l.b16 %v1309
    %v1886 = vunpack.c.l.b16 %v1310
    %v1887 = vunpack.c.h.b16 %v1310
    %v1888 = vunpack.c.l.b16 %v1311
    %v1889 = vunpack.c.h.b16 %v1311
    %v1890 = vunpack.c.l.b16 %v1312
    %v1891 = vunpack.c.h.b16 %v1312
    %v1892 = vunpack.c.l.b16 %v1313
    %v1893 = vunpack.c.l.b16 %v1314
    %v1894 = vunpack.c.h.b16 %v1314
    %v1895 = vunpack.c.l.b16 %v1315
    %v1896 = vunpack.c.h.b16 %v1315
    %v1897 = vunpack.c.l.b16 %v1316
    %v1898 = vunpack.c.h.b16 %v1316
    %v1899 = vunpack.c.l.b16 %v1317
    %v1900 = vunpack.c.l.b16 %v1318
    %v1901 = vunpack.c.h.b16 %v1318
    %v1902 = vunpack.c.l.b16 %v1319
    %v1903 = vunpack.c.h.b16 %v1319
    %v1904 = vunpack.c.l.b16 %v1320
    %v1905 = vunpack.c.h.b16 %v1320
    %v1906 = vunpack.c.l.b16 %v1321
    %v1907 = vunpack.c.l.b16 %v1322
    %v1908 = vunpack.c.h.b16 %v1322
    %v1909 = vunpack.c.l.b16 %v1323
    %v1910 = vunpack.c.h.b16 %v1323
    %v1911 = vunpack.c.l.b16 %v1324
    %v1912 = vunpack.c.h.b16 %v1324
    %v1913 = vunpack.c.l.b16 %v1325
    %v1914 = vunpack.c.l.b16 %v1326
    %v1915 = vunpack.c.h.b16 %v1326
    %v1916 = vunpack.c.l.b16 %v1327
    %v1917 = vunpack.c.h.b16 %v1327
    %v1918 = vunpack.c.l.b16 %v1328
    %v1919 = vunpack.c.h.b16 %v1328
    %v1920 = vunpack.c.l.b16 %v1329
    %v1921 = vunpack.c.l.b16 %v1330
    %v1922 = vunpack.c.h.b16 %v1330
    %v1923 = vunpack.c.l.b16 %v1331
    %v1924 = vunpack.c.h.b16 %v1331
    %v1925 = vunpack.c.l.b16 %v1332
    %v1926 = vunpack.c.h.b16 %v1332
    %v1927 = vunpack.c.l.b16 %v1333
    %v1928 = vunpack.c.l.b16 %v1334
    %v1929 = vunpack.c.h.b16 %v1334
    %v1930 = vunpack.c.l.b16 %v1335
    %v1931 = vunpack.c.h.b16 %v1335
    %v1932 = vunpack.c.l.b16 %v1336
    %v1933 = vunpack.c.h.b16 %v1336
    %v1934 = vunpack.c.l.b16 %v1337
    %v1935 = vunpack.c.l.b16 %v1338
    %v1936 = vunpack.c.h.b16 %v1338
    %v1937 = vunpack.c.l.b16 %v1339
    %v1938 = vunpack.c.h.b16 %v1339
    %v1939 = vunpack.c.l.b16 %v1340
    %v1940 = vunpack.c.h.b16 %v1340
    %v1941 = vunpack.c.l.b16 %v1341
    %v1942 = vunpack.c.l.b16 %v1342
    %v1943 = vunpack.c.h.b16 %v1342
    %v1944 = vunpack.c.l.b16 %v1343
    %v1945 = vunpack.c.h.b16 %v1343
    %v1946 = vunpack.c.l.b16 %v1344
    %v1947 = vunpack.c.h.b16 %v1344
    %v1948 = vunpack.c.l.b16 %v1345
    %v1949 = vunpack.c.l.b16 %v1346
    %v1950 = vunpack.c.h.b16 %v1346
    %v1951 = vunpack.c.l.b16 %v1347
    %v1952 = vunpack.c.h.b16 %v1347
    %v1953 = vunpack.c.l.b16 %v1348
    %v1954 = vunpack.c.h.b16 %v1348
    %v1955 = vunpack.c.l.b16 %v1349
    %v1956 = vunpack.c.l.b16 %v1350
    %v1957 = vunpack.c.h.b16 %v1350
    %v1958 = vunpack.c.l.b16 %v1351
    %v1959 = vunpack.c.h.b16 %v1351
    %v1960 = vunpack.c.l.b16 %v1352
    %v1961 = vunpack.c.h.b16 %v1352
    %v1962 = vunpack.c.l.b16 %v1353
    %v1963 = vunpack.c.l.b16 %v1354
    %v1964 = vunpack.c.h.b16 %v1354
    %v1965 = vunpack.c.l.b16 %v1355
    %v1966 = vunpack.c.h.b16 %v1355
    %v1967 = vunpack.c.l.b16 %v1356
    %v1968 = vunpack.c.h.b16 %v1356
    %v1969 = vunpack.c.l.b16 %v1357
    %v1970 = vunpack.c.l.b16 %v1358
    %v1971 = vunpack.c.h.b16 %v1358
    %v1972 = vunpack.c.l.b16 %v1359
    %v1973 = vunpack.c.h.b16 %v1359
    %v1974 = vunpack.c.l.b16 %v1360
    %v1975 = vunpack.c.h.b16 %v1360
    %v1976 = vunpack.c.l.b16 %v1361
    %v1977 = vunpack.c.l.b16 %v1362
    %v1978 = vunpack.c.h.b16 %v1362
    %v1979 = vunpack.c.l.b16 %v1363
    %v1980 = vunpack.c.h.b16 %v1363
    %v1981 = vunpack.c.l.b16 %v1364
    %v1982 = vunpack.c.h.b16 %v1364
    %v1983 = vunpack.c.l.b16 %v1365
    %v1984 = vunpack.c.l.b16 %v1366
    %v1985 = vunpack.c.h.b16 %v1366
    %v1986 = vunpack.c.l.b16 %v1367
    %v1987 = vunpack.c.h.b16 %v1367
    %v1988 = vunpack.c.l.b16 %v1368
    %v1989 = vunpack.c.h.b16 %v1368
    %v1990 = vunpack.c.l.b16 %v1369
    %v1991 = vunpack.c.l.b16 %v1370
    %v1992 = vunpack.c.h.b16 %v1370
    %v1993 = vunpack.c.l.b16 %v1371
    %v1994 = vunpack.c.h.b16 %v1371
    %v1995 = vunpack.c.l.b16 %v1372
    %v1996 = vunpack.c.h.b16 %v1372
    %v1997 = vunpack.c.l.b16 %v1373
    %v1998 = vunpack.c.l.b16 %v1374
    %v1999 = vunpack.c.h.b16 %v1374
    %v2000 = vunpack.c.l.b16 %v1375
    %v2001 = vunpack.c.h.b16 %v1375
    %v2002 = vunpack.c.l.b16 %v1376
    %v2003 = vunpack.c.h.b16 %v1376
    %v2004 = vunpack.c.l.b16 %v1377
    %v2005 = vunpack.c.l.b16 %v1378
    %v2006 = vunpack.c.h.b16 %v1378
    %v2007 = vunpack.c.l.b16 %v1379
    %v2008 = vunpack.c.h.b16 %v1379
    %v2009 = vunpack.c.l.b16 %v1380
    %v2010 = vunpack.c.h.b16 %v1380
    %v2011 = vunpack.c.l.b16 %v1381
    %v2012 = vunpack.c.l.b16 %v1382
    %v2013 = vunpack.c.h.b16 %v1382
    %v2014 = vunpack.c.l.b16 %v1383
    %v2015 = vunpack.c.h.b16 %v1383
    %v2016 = vunpack.c.l.b16 %v1384
    %v2017 = vunpack.c.h.b16 %v1384
    %v2018 = vunpack.c.l.b16 %v1385
    %v2019 = vunpack.c.l.b16 %v1386
    %v2020 = vunpack.c.h.b16 %v1386
    %v2021 = vunpack.c.l.b16 %v1387
    %v2022 = vunpack.c.h.b16 %v1387
    %v2023 = vunpack.c.l.b16 %v1388
    %v2024 = vunpack.c.h.b16 %v1388
    %v2025 = vunpack.c.l.b16 %v1389
    %v2026 = vunpack.c.l.b16 %v1390
    %v2027 = vunpack.c.h.b16 %v1390
    %v2028 = vunpack.c.l.b16 %v1391
    %v2029 = vunpack.c.h.b16 %v1391
    %v2030 = vunpack.c.l.b16 %v1392
    %v2031 = vunpack.c.h.b16 %v1392
    %v2032 = vunpack.c.l.b16 %v1393
    %v2033 = vunpack.c.l.b16 %v1394
    %v2034 = vunpack.c.h.b16 %v1394
    %v2035 = vunpack.c.l.b16 %v1395
    %v2036 = vunpack.c.h.b16 %v1395
    %v2037 = vunpack.c.l.b16 %v1396
    %v2038 = vunpack.c.h.b16 %v1396
    %v2039 = vunpack.c.l.b16 %v1397
    %v2040 = vunpack.c.l.b16 %v1398
    %v2041 = vunpack.c.h.b16 %v1398
    %v2042 = vunpack.c.l.b16 %v1399
    %v2043 = vunpack.c.h.b16 %v1399
    %v2044 = vunpack.c.l.b16 %v1400
    %v2045 = vunpack.c.h.b16 %v1400
    %v2046 = vunpack.c.l.b16 %v1401
    %v2047 = vunpack.c.l.b16 %v1402
    %v2048 = vunpack.c.h.b16 %v1402
    %v2049 = vunpack.c.l.b16 %v1403
    %v2050 = vunpack.c.h.b16 %v1403
    %v2051 = vunpack.c.l.b16 %v1404
    %v2052 = vunpack.c.h.b16 %v1404
    %v2053 = vunpack.c.l.b16 %v1405
    %v2054 = vunpack.c.l.b16 %v1406
    %v2055 = vunpack.c.h.b16 %v1406
    %v2056 = vunpack.c.l.b16 %v1407
    %v2057 = vunpack.c.h.b16 %v1407
    %v2058 = vunpack.c.l.b16 %v1408
    %v2059 = vunpack.c.h.b16 %v1408
    %v2060 = vunpack.c.l.b16 %v1409
    %v2061 = vunpack.c.l.b16 %v1410
    %v2062 = vunpack.c.h.b16 %v1410
    %v2063 = vunpack.c.l.b16 %v1411
    %v2064 = vunpack.c.h.b16 %v1411
    %v2065 = vunpack.c.l.b16 %v1412
    %v2066 = vunpack.c.h.b16 %v1412
    %v2067 = vunpack.c.l.b16 %v1413
    %v2068 = vunpack.c.l.b16 %v1414
    %v2069 = vunpack.c.h.b16 %v1414
    %v2070 = vunpack.c.l.b16 %v1415
    %v2071 = vunpack.c.h.b16 %v1415
    %v2072 = vunpack.c.l.b16 %v1416
    %v2073 = vunpack.c.h.b16 %v1416
    %v2074 = vunpack.c.l.b16 %v1417
    %v2075 = vunpack.c.l.b16 %v1418
    %v2076 = vunpack.c.h.b16 %v1418
    %v2077 = vunpack.c.l.b16 %v1419
    %v2078 = vunpack.c.h.b16 %v1419
    %v2079 = vunpack.c.l.b16 %v1420
    %v2080 = vunpack.c.h.b16 %v1420
    %v2081 = vunpack.c.l.b16 %v1421
    %v2082 = vunpack.c.l.b16 %v1422
    %v2083 = vunpack.c.h.b16 %v1422
    %v2084 = vunpack.c.l.b16 %v1423
    %v2085 = vunpack.c.h.b16 %v1423
    %v2086 = vunpack.c.l.b16 %v1424
    %v2087 = vunpack.c.h.b16 %v1424
    %v2088 = vunpack.c.l.b16 %v1425
    %v2089 = vunpack.c.l.b16 %v1426
    %v2090 = vunpack.c.h.b16 %v1426
    %v2091 = vunpack.c.l.b16 %v1427
    %v2092 = vunpack.c.h.b16 %v1427
    %v2093 = vunpack.c.l.b16 %v1428
    %v2094 = vunpack.c.h.b16 %v1428
    %v2095 = vunpack.c.l.b16 %v1429
    %v2096 = vunpack.c.l.b16 %v1430
    %v2097 = vunpack.c.h.b16 %v1430
    %v2098 = vunpack.c.l.b16 %v1431
    %v2099 = vunpack.c.h.b16 %v1431
    %v2100 = vunpack.c.l.b16 %v1432
    %v2101 = vunpack.c.h.b16 %v1432
    %v2102 = vunpack.c.l.b16 %v1433
    %v2103 = vunpack.c.l.b16 %v1434
    %v2104 = vunpack.c.h.b16 %v1434
    %v2105 = vunpack.c.l.b16 %v1435
    %v2106 = vunpack.c.h.b16 %v1435
    %v2107 = vunpack.c.l.b16 %v1436
    %v2108 = vunpack.c.h.b16 %v1436
    %v2109 = vunpack.c.l.b16 %v1437
    %v2110 = vunpack.c.l.b16 %v1438
    %v2111 = vunpack.c.h.b16 %v1438
    %v2112 = vunpack.c.l.b16 %v1439
    %v2113 = vunpack.c.h.b16 %v1439
    %v2114 = vunpack.c.l.b16 %v1440
    %v2115 = vunpack.c.h.b16 %v1440
    %v2116 = vunpack.c.l.b16 %v1441
    %v2117 = vunpack.c.l.b16 %v1442
    %v2118 = vunpack.c.h.b16 %v1442
    %v2119 = vunpack.c.l.b16 %v1443
    %v2120 = vunpack.c.h.b16 %v1443
    %v2121 = vunpack.c.l.b16 %v1444
    %v2122 = vunpack.c.h.b16 %v1444
    %v2123 = vunpack.c.l.b16 %v1445
    %v2124 = vunpack.c.l.b16 %v1446
    %v2125 = vunpack.c.h.b16 %v1446
    %v2126 = vunpack.c.l.b16 %v1447
    %v2127 = vunpack.c.h.b16 %v1447
    %v2128 = vunpack.c.l.b16 %v1448
    %v2129 = vunpack.c.h.b16 %v1448
    %v2130 = vunpack.c.l.b16 %v1449
    %v2131 = vunpack.c.l.b16 %v1450
    %v2132 = vunpack.c.h.b16 %v1450
    %v2133 = vunpack.c.l.b16 %v1451
    %v2134 = vunpack.c.h.b16 %v1451
    %v2135 = vunpack.c.l.b16 %v1452
    %v2136 = vunpack.c.h.b16 %v1452
    %v2137 = vunpack.c.l.b16 %v1453
    %v2138 = vunpack.c.l.b16 %v1454
    %v2139 = vunpack.c.h.b16 %v1454
    %v2140 = vunpack.c.l.b16 %v1455
    %v2141 = vunpack.c.h.b16 %v1455
    %v2142 = vunpack.c.l.b16 %v1456
    %v2143 = vunpack.c.h.b16 %v1456
    %v2144 = vunpack.c.l.b16 %v1457
    %v2145 = vunpack.c.l.b16 %v1458
    %v2146 = vunpack.c.h.b16 %v1458
    %v2147 = vunpack.c.l.b16 %v1459
    %v2148 = vunpack.c.h.b16 %v1459
    %v2149 = vunpack.c.l.b16 %v1460
    %v2150 = vunpack.c.h.b16 %v1460
    %v2151 = vunpack.c.l.b16 %v1461
    %v2152 = vunpack.c.l.b16 %v1462
    %v2153 = vunpack.c.h.b16 %v1462
    %v2154 = vunpack.c.l.b16 %v1463
    %v2155 = vunpack.c.h.b16 %v1463
    %v2156 = vunpack.c.l.b16 %v1464
    %v2157 = vunpack.c.h.b16 %v1464
    %v2158 = vunpack.c.l.b16 %v1465
    %v2159 = vunpack.c.l.b16 %v1466
    %v2160 = vunpack.c.h.b16 %v1466
    %v2161 = vunpack.c.l.b16 %v1467
    %v2162 = vunpack.c.h.b16 %v1467
    %v2163 = vunpack.c.l.b16 %v1468
    %v2164 = vunpack.c.h.b16 %v1468
    %v2165 = vunpack.c.l.b16 %v1469
    %v2166 = vunpack.c.l.b16 %v1470
    %v2167 = vunpack.c.h.b16 %v1470
    %v2168 = vunpack.c.l.b16 %v1471
    %v2169 = vunpack.c.h.b16 %v1471
    %v2170 = vunpack.c.l.b16 %v1472
    %v2171 = vunpack.c.h.b16 %v1472
    %v2172 = vunpack.c.l.b16 %v1473
    %v2173 = vunpack.c.l.b16 %v1474
    %v2174 = vunpack.c.h.b16 %v1474
    %v2175 = vunpack.c.l.b16 %v1475
    %v2176 = vunpack.c.h.b16 %v1475
    %v2177 = vunpack.c.l.b16 %v1476
    %v2178 = vunpack.c.h.b16 %v1476
    %v2179 = vunpack.c.l.b16 %v1477
    %v2180 = vunpack.c.l.b16 %v1478
    %v2181 = vunpack.c.h.b16 %v1478
    %v2182 = vunpack.c.l.b16 %v1479
    %v2183 = vunpack.c.h.b16 %v1479
    %v2184 = vunpack.c.l.b16 %v1480
    %v2185 = vunpack.c.h.b16 %v1480
    %v2186 = vunpack.c.l.b16 %v1481
    %v2187 = vunpack.c.l.b16 %v1482
    %v2188 = vunpack.c.h.b16 %v1482
    %v2189 = vunpack.c.l.b16 %v1483
    %v2190 = vunpack.c.h.b16 %v1483
    %v2191 = vunpack.c.l.b16 %v1484
    %v2192 = vunpack.c.h.b16 %v1484
    %v2193 = vunpack.c.l.b16 %v1485
    %v2194 = vunpack.c.l.b16 %v1486
    %v2195 = vunpack.c.h.b16 %v1486
    %v2196 = vunpack.c.l.b16 %v1487
    %v2197 = vunpack.c.h.b16 %v1487
    %v2198 = vunpack.c.l.b16 %v1488
    %v2199 = vunpack.c.h.b16 %v1488
    %v2200 = vunpack.c.l.b16 %v1489
    %v2201 = vunpack.c.l.b16 %v1490
    %v2202 = vunpack.c.h.b16 %v1490
    %v2203 = vunpack.c.l.b16 %v1491
    %v2204 = vunpack.c.h.b16 %v1491
    %v2205 = vunpack.c.l.b16 %v1492
    %v2206 = vunpack.c.h.b16 %v1492
    %v2207 = vunpack.c.l.b16 %v1493
    %v2208 = vunpack.c.l.b16 %v1494
    %v2209 = vunpack.c.h.b16 %v1494
    %v2210 = vunpack.c.l.b16 %v1495
    %v2211 = vunpack.c.h.b16 %v1495
    %v2212 = vunpack.c.l.b16 %v1496
    %v2213 = vunpack.c.h.b16 %v1496
    %v2214 = vunpack.c.l.b16 %v1497
    %v2215 = vunpack.c.l.b16 %v1498
    %v2216 = vunpack.c.h.b16 %v1498
    %v2217 = vunpack.c.l.b16 %v1499
    %v2218 = vunpack.c.h.b16 %v1499
    %v2219 = vunpack.c.l.b16 %v1500
    %v2220 = vunpack.c.h.b16 %v1500
    %v2221 = vunpack.c.l.b16 %v1501
    %v2222 = vpack.c.b16 %v1781, %v1774
    %v2223 = vpack.c.b16 %v1782, %v1775
    %v2224 = vpack.c.b16 %v1783, %v1776
    %v2225 = vpack.c.b16 %v1784, %v1777
    %v2226 = vpack.c.b16 %v1785, %v1778
    %v2227 = vpack.c.b16 %v1786, %v1779
    %v2228 = vpack.c.b16 %v1787, %v1780
    %v2229 = vpack.c.b16 %v1795, %v1788
    %v2230 = vpack.c.b16 %v1796, %v1789
    %v2231 = vpack.c.b16 %v1797, %v1790
    %v2232 = vpack.c.b16 %v1798, %v1791
    %v2233 = vpack.c.b16 %v1799, %v1792
    %v2234 = vpack.c.b16 %v1800, %v1793
    %v2235 = vpack.c.b16 %v1801, %v1794
    %v2236 = vpack.c.b16 %v1809, %v1802
    %v2237 = vpack.c.b16 %v1810, %v1803
    %v2238 = vpack.c.b16 %v1811, %v1804
    %v2239 = vpack.c.b16 %v1812, %v1805
    %v2240 = vpack.c.b16 %v1813, %v1806
    %v2241 = vpack.c.b16 %v1814, %v1807
    %v2242 = vpack.c.b16 %v1815, %v1808
    %v2243 = vpack.c.b16 %v1823, %v1816
    %v2244 = vpack.c.b16 %v1824, %v1817
    %v2245 = vpack.c.b16 %v1825, %v1818
    %v2246 = vpack.c.b16 %v1826, %v1819
    %v2247 = vpack.c.b16 %v1827, %v1820
    %v2248 = vpack.c.b16 %v1828, %v1821
    %v2249 = vpack.c.b16 %v1829, %v1822
    %v2250 = vpack.c.b16 %v1837, %v1830
    %v2251 = vpack.c.b16 %v1838, %v1831
    %v2252 = vpack.c.b16 %v1839, %v1832
    %v2253 = vpack.c.b16 %v1840, %v1833
    %v2254 = vpack.c.b16 %v1841, %v1834
    %v2255 = vpack.c.b16 %v1842, %v1835
    %v2256 = vpack.c.b16 %v1843, %v1836
    %v2257 = vpack.c.b16 %v1851, %v1844
    %v2258 = vpack.c.b16 %v1852, %v1845
    %v2259 = vpack.c.b16 %v1853, %v1846
    %v2260 = vpack.c.b16 %v1854, %v1847
    %v2261 = vpack.c.b16 %v1855, %v1848
    %v2262 = vpack.c.b16 %v1856, %v1849
    %v2263 = vpack.c.b16 %v1857, %v1850
    %v2264 = vpack.c.b16 %v1865, %v1858
    %v2265 = vpack.c.b16 %v1866, %v1859
    %v2266 = vpack.c.b16 %v1867, %v1860
    %v2267 = vpack.c.b16 %v1868, %v1861
    %v2268 = vpack.c.b16 %v1869, %v1862
    %v2269 = vpack.c.b16 %v1870, %v1863
    %v2270 = vpack.c.b16 %v1871, %v1864
    %v2271 = vpack.c.b16 %v1879, %v1872
    %v2272 = vpack.c.b16 %v1880, %v1873
    %v2273 = vpack.c.b16 %v1881, %v1874
    %v2274 = vpack.c.b16 %v1882, %v1875
    %v2275 = vpack.c.b16 %v1883, %v1876
    %v2276 = vpack.c.b16 %v1884, %v1877
    %v2277 = vpack.c.b16 %v1885, %v1878
    %v2278 = vpack.c.b16 %v1893, %v1886
    %v2279 = vpack.c.b16 %v1894, %v1887
    %v2280 = vpack.c.b16 %v1895, %v1888
    %v2281 = vpack.c.b16 %v1896, %v1889
    %v2282 = vpack.c.b16 %v1897, %v1890
    %v2283 = vpack.c.b16 %v1898, %v1891
    %v2284 = vpack.c.b16 %v1899, %v1892
    %v2285 = vpack.c.b16 %v1907, %v1900
    %v2286 = vpack.c.b16 %v1908, %v1901
    %v2287 = vpack.c.b16 %v1909, %v1902
    %v2288 = vpack.c.b16 %v1910, %v1903
    %v2289 = vpack.c.b16 %v1911, %v1904
    %v2290 = vpack.c.b16 %v1912, %v1905
    %v2291 = vpack.c.b16 %v1913, %v1906
    %v2292 = vpack.c.b16 %v1921, %v1914
    %v2293 = vpack.c.b16 %v1922, %v1915
    %v2294 = vpack.c.b16 %v1923, %v1916
    %v2295 = vpack.c.b16 %v1924, %v1917
    %v2296 = vpack.c.b16 %v1925, %v1918
    %v2297 = vpack.c.b16 %v1926, %v1919
    %v2298 = vpack.c.b16 %v1927, %v1920
    %v2299 = vpack.c.b16 %v1935, %v1928
    %v2300 = vpack.c.b16 %v1936, %v1929
    %v2301 = vpack.c.b16 %v1937, %v1930
    %v2302 = vpack.c.b16 %v1938, %v1931
    %v2303 = vpack.c.b16 %v1939, %v1932
    %v2304 = vpack.c.b16 %v1940, %v1933
    %v2305 = vpack.c.b16 %v1941, %v1934
    %v2306 = vpack.c.b16 %v1949, %v1942
    %v2307 = vpack.c.b16 %v1950, %v1943
    %v2308 = vpack.c.b16 %v1951, %v1944
    %v2309 = vpack.c.b16 %v1952, %v1945
    %v2310 = vpack.c.b16 %v1953, %v1946
    %v2311 = vpack.c.b16 %v1954, %v1947
    %v2312 = vpack.c.b16 %v1955, %v1948
    %v2313 = vpack.c.b16 %v1963, %v1956
    %v2314 = vpack.c.b16 %v1964, %v1957
    %v2315 = vpack.c.b16 %v1965, %v1958
    %v2316 = vpack.c.b16 %v1966, %v1959
    %v2317 = vpack.c.b16 %v1967, %v1960
    %v2318 = vpack.c.b16 %v1968, %v1961
    %v2319 = vpack.c.b16 %v1969, %v1962
    %v2320 = vpack.c.b16 %v1977, %v1970
    %v2321 = vpack.c.b16 %v1978, %v1971
    %v2322 = vpack.c.b16 %v1979, %v1972
    %v2323 = vpack.c.b16 %v1980, %v1973
    %v2324 = vpack.c.b16 %v1981, %v1974
    %v2325 = vpack.c.b16 %v1982, %v1975
    %v2326 = vpack.c.b16 %v1983, %v1976
    %v2327 = vpack.c.b16 %v1991, %v1984
    %v2328 = vpack.c.b16 %v1992, %v1985
    %v2329 = vpack.c.b16 %v1993, %v1986
    %v2330 = vpack.c.b16 %v1994, %v1987
    %v2331 = vpack.c.b16 %v1995, %v1988
    %v2332 = vpack.c.b16 %v1996, %v1989
    %v2333 = vpack.c.b16 %v1997, %v1990
    %v2334 = vpack.c.b16 %v2005, %v1998
    %v2335 = vpack.c.b16 %v2006, %v1999
    %v2336 = vpack.c.b16 %v2007, %v2000
    %v2337 = vpack.c.b16 %v2008, %v2001
    %v2338 = vpack.c.b16 %v2009, %v2002
    %v2339 = vpack.c.b16 %v2010, %v2003
    %v2340 = vpack.c.b16 %v2011, %v2004
    %v2341 = vpack.c.b16 %v2019, %v2012
    %v2342 = vpack.c.b16 %v2020, %v2013
    %v2343 = vpack.c.b16 %v2021, %v2014
    %v2344 = vpack.c.b16 %v2022, %v2015
    %v2345 = vpack.c.b16 %v2023, %v2016
    %v2346 = vpack.c.b16 %v2024, %v2017
    %v2347 = vpack.c.b16 %v2025, %v2018
    %v2348 = vpack.c.b16 %v2033, %v2026
    %v2349 = vpack.c.b16 %v2034, %v2027
    %v2350 = vpack.c.b16 %v2035, %v2028
    %v2351 = vpack.c.b16 %v2036, %v2029
    %v2352 = vpack.c.b16 %v2037, %v2030
    %v2353 = vpack.c.b16 %v2038, %v2031
    %v2354 = vpack.c.b16 %v2039, %v2032
    %v2355 = vpack.c.b16 %v2047, %v2040
    %v2356 = vpack.c.b16 %v2048, %v2041
    %v2357 = vpack.c.b16 %v2049, %v2042
    %v2358 = vpack.c.b16 %v2050, %v2043
    %v2359 = vpack.c.b16 %v2051, %v2044
    %v2360 = vpack.c.b16 %v2052, %v2045
    %v2361 = vpack.c.b16 %v2053, %v2046
    %v2362 = vpack.c.b16 %v2061, %v2054
    %v2363 = vpack.c.b16 %v2062, %v2055
    %v2364 = vpack.c.b16 %v2063, %v2056
    %v2365 = vpack.c.b16 %v2064, %v2057
    %v2366 = vpack.c.b16 %v2065, %v2058
    %v2367 = vpack.c.b16 %v2066, %v2059
    %v2368 = vpack.c.b16 %v2067, %v2060
    %v2369 = vpack.c.b16 %v2075, %v2068
    %v2370 = vpack.c.b16 %v2076, %v2069
    %v2371 = vpack.c.b16 %v2077, %v2070
    %v2372 = vpack.c.b16 %v2078, %v2071
    %v2373 = vpack.c.b16 %v2079, %v2072
    %v2374 = vpack.c.b16 %v2080, %v2073
    %v2375 = vpack.c.b16 %v2081, %v2074
    %v2376 = vpack.c.b16 %v2089, %v2082
    %v2377 = vpack.c.b16 %v2090, %v2083
    %v2378 = vpack.c.b16 %v2091, %v2084
    %v2379 = vpack.c.b16 %v2092, %v2085
    %v2380 = vpack.c.b16 %v2093, %v2086
    %v2381 = vpack.c.b16 %v2094, %v2087
    %v2382 = vpack.c.b16 %v2095, %v2088
    %v2383 = vpack.c.b16 %v2103, %v2096
    %v2384 = vpack.c.b16 %v2104, %v2097
    %v2385 = vpack.c.b16 %v2105, %v2098
    %v2386 = vpack.c.b16 %v2106, %v2099
    %v2387 = vpack.c.b16 %v2107, %v2100
    %v2388 = vpack.c.b16 %v2108, %v2101
    %v2389 = vpack.c.b16 %v2109, %v2102
    %v2390 = vpack.c.b16 %v2117, %v2110
    %v2391 = vpack.c.b16 %v2118, %v2111
    %v2392 = vpack.c.b16 %v2119, %v2112
    %v2393 = vpack.c.b16 %v2120, %v2113
    %v2394 = vpack.c.b16 %v2121, %v2114
    %v2395 = vpack.c.b16 %v2122, %v2115
    %v2396 = vpack.c.b16 %v2123, %v2116
    %v2397 = vpack.c.b16 %v2131, %v2124
    %v2398 = vpack.c.b16 %v2132, %v2125
    %v2399 = vpack.c.b16 %v2133, %v2126
    %v2400 = vpack.c.b16 %v2134, %v2127
    %v2401 = vpack.c.b16 %v2135, %v2128
    %v2402 = vpack.c.b16 %v2136, %v2129
    %v2403 = vpack.c.b16 %v2137, %v2130
    %v2404 = vpack.c.b16 %v2145, %v2138
    %v2405 = vpack.c.b16 %v2146, %v2139
    %v2406 = vpack.c.b16 %v2147, %v2140
    %v2407 = vpack.c.b16 %v2148, %v2141
    %v2408 = vpack.c.b16 %v2149, %v2142
    %v2409 = vpack.c.b16 %v2150, %v2143
    %v2410 = vpack.c.b16 %v2151, %v2144
    %v2411 = vpack.c.b16 %v2159, %v2152
    %v2412 = vpack.c.b16 %v2160, %v2153
    %v2413 = vpack.c.b16 %v2161, %v2154
    %v2414 = vpack.c.b16 %v2162, %v2155
    %v2415 = vpack.c.b16 %v2163, %v2156
    %v2416 = vpack.c.b16 %v2164, %v2157
    %v2417 = vpack.c.b16 %v2165, %v2158
    %v2418 = vpack.c.b16 %v2173, %v2166
    %v2419 = vpack.c.b16 %v2174, %v2167
    %v2420 = vpack.c.b16 %v2175, %v2168
    %v2421 = vpack.c.b16 %v2176, %v2169
    %v2422 = vpack.c.b16 %v2177, %v2170
    %v2423 = vpack.c.b16 %v2178, %v2171
    %v2424 = vpack.c.b16 %v2179, %v2172
    %v2425 = vpack.c.b16 %v2187, %v2180
    %v2426 = vpack.c.b16 %v2188, %v2181
    %v2427 = vpack.c.b16 %v2189, %v2182
    %v2428 = vpack.c.b16 %v2190, %v2183
    %v2429 = vpack.c.b16 %v2191, %v2184
    %v2430 = vpack.c.b16 %v2192, %v2185
    %v2431 = vpack.c.b16 %v2193, %v2186
    %v2432 = vpack.c.b16 %v2201, %v2194
    %v2433 = vpack.c.b16 %v2202, %v2195
    %v2434 = vpack.c.b16 %v2203, %v2196
    %v2435 = vpack.c.b16 %v2204, %v2197
    %v2436 = vpack.c.b16 %v2205, %v2198
    %v2437 = vpack.c.b16 %v2206, %v2199
    %v2438 = vpack.c.b16 %v2207, %v2200
    %v2439 = vpack.c.b16 %v2215, %v2208
    %v2440 = vpack.c.b16 %v2216, %v2209
    %v2441 = vpack.c.b16 %v2217, %v2210
    %v2442 = vpack.c.b16 %v2218, %v2211
    %v2443 = vpack.c.b16 %v2219, %v2212
    %v2444 = vpack.c.b16 %v2220, %v2213
    %v2445 = vpack.c.b16 %v2221, %v2214
    %2670 = vmatpush.bf16.msra.mxu0 %v2271
    %2671 = vmatpush.bf16.msra.mxu0 %v2264
    %2672 = vmatpush.bf16.msra.mxu0 %v2257
    %2673 = vmatpush.bf16.msra.mxu0 %v2250
    %2674 = vmatpush.bf16.msra.mxu0 %v2243
    %2675 = vmatpush.bf16.msra.mxu0 %v2236
    %2676 = vmatpush.bf16.msra.mxu0 %v2229
    %2677 = vmatpush.bf16.msra.mxu0 %v2222
    %2678 = vmatmul.bf16.gmra.mxu0 %v1242
    %v2679 = vpop.f32.mrf.mxu0
    %v2680 = vadd.f32 %v1504, %v2679
    %v2681 = vpop.f32.mrf.mxu0
    %2682 = vdwg.mxu0
    %2683 = vmatpush.bf16.msra.mxu0 %v2327
    %2684 = vmatpush.bf16.msra.mxu0 %v2320
    %2685 = vmatpush.bf16.msra.mxu0 %v2313
    %2686 = vmatpush.bf16.msra.mxu0 %v2306
    %2687 = vmatpush.bf16.msra.mxu0 %v2299
    %2688 = vmatpush.bf16.msra.mxu0 %v2292
    %2689 = vmatpush.bf16.msra.mxu0 %v2285
    %2690 = vmatpush.bf16.msra.mxu0 %v2278
    %2691 = vmatmul.bf16.gmra.mxu0 %v1243
    %v2692 = vpop.f32.mrf.mxu0
    %v2693 = vadd.f32 %v2680, %v2692
    %v2694 = vpop.f32.mrf.mxu0
    %2695 = vdwg.mxu0
    %2696 = vmatpush.bf16.msra.mxu0 %v2383
    %2697 = vmatpush.bf16.msra.mxu0 %v2376
    %2698 = vmatpush.bf16.msra.mxu0 %v2369
    %2699 = vmatpush.bf16.msra.mxu0 %v2362
    %2700 = vmatpush.bf16.msra.mxu0 %v2355
    %2701 = vmatpush.bf16.msra.mxu0 %v2348
    %2702 = vmatpush.bf16.msra.mxu0 %v2341
    %2703 = vmatpush.bf16.msra.mxu0 %v2334
    %2704 = vmatmul.bf16.gmra.mxu0 %v1244
    %v2705 = vpop.f32.mrf.mxu0
    %v2706 = vadd.f32 %v2693, %v2705
    %v2707 = vpop.f32.mrf.mxu0
    %2708 = vdwg.mxu0
    %2709 = vmatpush.bf16.msra.mxu0 %v2439
    %2710 = vmatpush.bf16.msra.mxu0 %v2432
    %2711 = vmatpush.bf16.msra.mxu0 %v2425
    %2712 = vmatpush.bf16.msra.mxu0 %v2418
    %2713 = vmatpush.bf16.msra.mxu0 %v2411
    %2714 = vmatpush.bf16.msra.mxu0 %v2404
    %2715 = vmatpush.bf16.msra.mxu0 %v2397
    %2716 = vmatpush.bf16.msra.mxu0 %v2390
    %2717 = vmatmul.bf16.gmra.mxu0 %v1245
    %v2718 = vpop.f32.mrf.mxu0
    %v2719 = vadd.f32 %v2706, %v2718
    %v2720 = vpop.f32.mrf.mxu0
    %2721 = vdwg.mxu0
    %2722 = vmatpush.bf16.msra.mxu0 %v2272
    %2723 = vmatpush.bf16.msra.mxu0 %v2265
    %2724 = vmatpush.bf16.msra.mxu0 %v2258
    %2725 = vmatpush.bf16.msra.mxu0 %v2251
    %2726 = vmatpush.bf16.msra.mxu0 %v2244
    %2727 = vmatpush.bf16.msra.mxu0 %v2237
    %2728 = vmatpush.bf16.msra.mxu0 %v2230
    %2729 = vmatpush.bf16.msra.mxu0 %v2223
    %2730 = vmatmul.bf16.gmra.mxu0 %v1242
    %v2731 = vpop.f32.mrf.mxu0
    %v2732 = vadd.f32 %v1505, %v2731
    %v2733 = vpop.f32.mrf.mxu0
    %2734 = vdwg.mxu0
    %2735 = vmatpush.bf16.msra.mxu0 %v2328
    %2736 = vmatpush.bf16.msra.mxu0 %v2321
    %2737 = vmatpush.bf16.msra.mxu0 %v2314
    %2738 = vmatpush.bf16.msra.mxu0 %v2307
    %2739 = vmatpush.bf16.msra.mxu0 %v2300
    %2740 = vmatpush.bf16.msra.mxu0 %v2293
    %2741 = vmatpush.bf16.msra.mxu0 %v2286
    %2742 = vmatpush.bf16.msra.mxu0 %v2279
    %2743 = vmatmul.bf16.gmra.mxu0 %v1243
    %v2744 = vpop.f32.mrf.mxu0
    %v2745 = vadd.f32 %v2732, %v2744
    %v2746 = vpop.f32.mrf.mxu0
    %2747 = vdwg.mxu0
    %2748 = vmatpush.bf16.msra.mxu0 %v2384
    %2749 = vmatpush.bf16.msra.mxu0 %v2377
    %2750 = vmatpush.bf16.msra.mxu0 %v2370
    %2751 = vmatpush.bf16.msra.mxu0 %v2363
    %2752 = vmatpush.bf16.msra.mxu0 %v2356
    %2753 = vmatpush.bf16.msra.mxu0 %v2349
    %2754 = vmatpush.bf16.msra.mxu0 %v2342
    %2755 = vmatpush.bf16.msra.mxu0 %v2335
    %2756 = vmatmul.bf16.gmra.mxu0 %v1244
    %v2757 = vpop.f32.mrf.mxu0
    %v2758 = vadd.f32 %v2745, %v2757
    %v2759 = vpop.f32.mrf.mxu0
    %2760 = vdwg.mxu0
    %2761 = vmatpush.bf16.msra.mxu0 %v2440
    %2762 = vmatpush.bf16.msra.mxu0 %v2433
    %2763 = vmatpush.bf16.msra.mxu0 %v2426
    %2764 = vmatpush.bf16.msra.mxu0 %v2419
    %2765 = vmatpush.bf16.msra.mxu0 %v2412
    %2766 = vmatpush.bf16.msra.mxu0 %v2405
    %2767 = vmatpush.bf16.msra.mxu0 %v2398
    %2768 = vmatpush.bf16.msra.mxu0 %v2391
    %2769 = vmatmul.bf16.gmra.mxu0 %v1245
    %v2770 = vpop.f32.mrf.mxu0
    %v2771 = vadd.f32 %v2758, %v2770
    %v2772 = vpop.f32.mrf.mxu0
    %2773 = vdwg.mxu0
    %2774 = vmatpush.bf16.msra.mxu0 %v2273
    %2775 = vmatpush.bf16.msra.mxu0 %v2266
    %2776 = vmatpush.bf16.msra.mxu0 %v2259
    %2777 = vmatpush.bf16.msra.mxu0 %v2252
    %2778 = vmatpush.bf16.msra.mxu0 %v2245
    %2779 = vmatpush.bf16.msra.mxu0 %v2238
    %2780 = vmatpush.bf16.msra.mxu0 %v2231
    %2781 = vmatpush.bf16.msra.mxu0 %v2224
    %2782 = vmatmul.bf16.gmra.mxu0 %v1242
    %v2783 = vpop.f32.mrf.mxu0
    %v2784 = vadd.f32 %v1506, %v2783
    %v2785 = vpop.f32.mrf.mxu0
    %2786 = vdwg.mxu0
    %2787 = vmatpush.bf16.msra.mxu0 %v2329
    %2788 = vmatpush.bf16.msra.mxu0 %v2322
    %2789 = vmatpush.bf16.msra.mxu0 %v2315
    %2790 = vmatpush.bf16.msra.mxu0 %v2308
    %2791 = vmatpush.bf16.msra.mxu0 %v2301
    %2792 = vmatpush.bf16.msra.mxu0 %v2294
    %2793 = vmatpush.bf16.msra.mxu0 %v2287
    %2794 = vmatpush.bf16.msra.mxu0 %v2280
    %2795 = vmatmul.bf16.gmra.mxu0 %v1243
    %v2796 = vpop.f32.mrf.mxu0
    %v2797 = vadd.f32 %v2784, %v2796
    %v2798 = vpop.f32.mrf.mxu0
    %2799 = vdwg.mxu0
    %2800 = vmatpush.bf16.msra.mxu0 %v2385
    %2801 = vmatpush.bf16.msra.mxu0 %v2378
    %2802 = vmatpush.bf16.msra.mxu0 %v2371
    %2803 = vmatpush.bf16.msra.mxu0 %v2364
    %2804 = vmatpush.bf16.msra.mxu0 %v2357
    %2805 = vmatpush.bf16.msra.mxu0 %v2350
    %2806 = vmatpush.bf16.msra.mxu0 %v2343
    %2807 = vmatpush.bf16.msra.mxu0 %v2336
    %2808 = vmatmul.bf16.gmra.mxu0 %v1244
    %v2809 = vpop.f32.mrf.mxu0
    %v2810 = vadd.f32 %v2797, %v2809
    %v2811 = vpop.f32.mrf.mxu0
    %2812 = vdwg.mxu0
    %2813 = vmatpush.bf16.msra.mxu0 %v2441
    %2814 = vmatpush.bf16.msra.mxu0 %v2434
    %2815 = vmatpush.bf16.msra.mxu0 %v2427
    %2816 = vmatpush.bf16.msra.mxu0 %v2420
    %2817 = vmatpush.bf16.msra.mxu0 %v2413
    %2818 = vmatpush.bf16.msra.mxu0 %v2406
    %2819 = vmatpush.bf16.msra.mxu0 %v2399
    %2820 = vmatpush.bf16.msra.mxu0 %v2392
    %2821 = vmatmul.bf16.gmra.mxu0 %v1245
    %v2822 = vpop.f32.mrf.mxu0
    %v2823 = vadd.f32 %v2810, %v2822
    %v2824 = vpop.f32.mrf.mxu0
    %2825 = vdwg.mxu0
    %2826 = vmatpush.bf16.msra.mxu0 %v2274
    %2827 = vmatpush.bf16.msra.mxu0 %v2267
    %2828 = vmatpush.bf16.msra.mxu0 %v2260
    %2829 = vmatpush.bf16.msra.mxu0 %v2253
    %2830 = vmatpush.bf16.msra.mxu0 %v2246
    %2831 = vmatpush.bf16.msra.mxu0 %v2239
    %2832 = vmatpush.bf16.msra.mxu0 %v2232
    %2833 = vmatpush.bf16.msra.mxu0 %v2225
    %2834 = vmatmul.bf16.gmra.mxu0 %v1242
    %v2835 = vpop.f32.mrf.mxu0
    %v2836 = vadd.f32 %v1507, %v2835
    %v2837 = vpop.f32.mrf.mxu0
    %2838 = vdwg.mxu0
    %2839 = vmatpush.bf16.msra.mxu0 %v2330
    %2840 = vmatpush.bf16.msra.mxu0 %v2323
    %2841 = vmatpush.bf16.msra.mxu0 %v2316
    %2842 = vmatpush.bf16.msra.mxu0 %v2309
    %2843 = vmatpush.bf16.msra.mxu0 %v2302
    %2844 = vmatpush.bf16.msra.mxu0 %v2295
    %2845 = vmatpush.bf16.msra.mxu0 %v2288
    %2846 = vmatpush.bf16.msra.mxu0 %v2281
    %2847 = vmatmul.bf16.gmra.mxu0 %v1243
    %v2848 = vpop.f32.mrf.mxu0
    %v2849 = vadd.f32 %v2836, %v2848
    %v2850 = vpop.f32.mrf.mxu0
    %2851 = vdwg.mxu0
    %2852 = vmatpush.bf16.msra.mxu0 %v2386
    %2853 = vmatpush.bf16.msra.mxu0 %v2379
    %2854 = vmatpush.bf16.msra.mxu0 %v2372
    %2855 = vmatpush.bf16.msra.mxu0 %v2365
    %2856 = vmatpush.bf16.msra.mxu0 %v2358
    %2857 = vmatpush.bf16.msra.mxu0 %v2351
    %2858 = vmatpush.bf16.msra.mxu0 %v2344
    %2859 = vmatpush.bf16.msra.mxu0 %v2337
    %2860 = vmatmul.bf16.gmra.mxu0 %v1244
    %v2861 = vpop.f32.mrf.mxu0
    %v2862 = vadd.f32 %v2849, %v2861
    %v2863 = vpop.f32.mrf.mxu0
    %2864 = vdwg.mxu0
    %2865 = vmatpush.bf16.msra.mxu0 %v2442
    %2866 = vmatpush.bf16.msra.mxu0 %v2435
    %2867 = vmatpush.bf16.msra.mxu0 %v2428
    %2868 = vmatpush.bf16.msra.mxu0 %v2421
    %2869 = vmatpush.bf16.msra.mxu0 %v2414
    %2870 = vmatpush.bf16.msra.mxu0 %v2407
    %2871 = vmatpush.bf16.msra.mxu0 %v2400
    %2872 = vmatpush.bf16.msra.mxu0 %v2393
    %2873 = vmatmul.bf16.gmra.mxu0 %v1245
    %v2874 = vpop.f32.mrf.mxu0
    %v2875 = vadd.f32 %v2862, %v2874
    %v2876 = vpop.f32.mrf.mxu0
    %2877 = vdwg.mxu0
    %2878 = vmatpush.bf16.msra.mxu0 %v2275
    %2879 = vmatpush.bf16.msra.mxu0 %v2268
    %2880 = vmatpush.bf16.msra.mxu0 %v2261
    %2881 = vmatpush.bf16.msra.mxu0 %v2254
    %2882 = vmatpush.bf16.msra.mxu0 %v2247
    %2883 = vmatpush.bf16.msra.mxu0 %v2240
    %2884 = vmatpush.bf16.msra.mxu0 %v2233
    %2885 = vmatpush.bf16.msra.mxu0 %v2226
    %2886 = vmatmul.bf16.gmra.mxu0 %v1242
    %v2887 = vpop.f32.mrf.mxu0
    %v2888 = vadd.f32 %v1508, %v2887
    %v2889 = vpop.f32.mrf.mxu0
    %2890 = vdwg.mxu0
    %2891 = vmatpush.bf16.msra.mxu0 %v2331
    %2892 = vmatpush.bf16.msra.mxu0 %v2324
    %2893 = vmatpush.bf16.msra.mxu0 %v2317
    %2894 = vmatpush.bf16.msra.mxu0 %v2310
    %2895 = vmatpush.bf16.msra.mxu0 %v2303
    %2896 = vmatpush.bf16.msra.mxu0 %v2296
    %2897 = vmatpush.bf16.msra.mxu0 %v2289
    %2898 = vmatpush.bf16.msra.mxu0 %v2282
    %2899 = vmatmul.bf16.gmra.mxu0 %v1243
    %v2900 = vpop.f32.mrf.mxu0
    %v2901 = vadd.f32 %v2888, %v2900
    %v2902 = vpop.f32.mrf.mxu0
    %2903 = vdwg.mxu0
    %2904 = vmatpush.bf16.msra.mxu0 %v2387
    %2905 = vmatpush.bf16.msra.mxu0 %v2380
    %2906 = vmatpush.bf16.msra.mxu0 %v2373
    %2907 = vmatpush.bf16.msra.mxu0 %v2366
    %2908 = vmatpush.bf16.msra.mxu0 %v2359
    %2909 = vmatpush.bf16.msra.mxu0 %v2352
    %2910 = vmatpush.bf16.msra.mxu0 %v2345
    %2911 = vmatpush.bf16.msra.mxu0 %v2338
    %2912 = vmatmul.bf16.gmra.mxu0 %v1244
    %v2913 = vpop.f32.mrf.mxu0
    %v2914 = vadd.f32 %v2901, %v2913
    %v2915 = vpop.f32.mrf.mxu0
    %2916 = vdwg.mxu0
    %2917 = vmatpush.bf16.msra.mxu0 %v2443
    %2918 = vmatpush.bf16.msra.mxu0 %v2436
    %2919 = vmatpush.bf16.msra.mxu0 %v2429
    %2920 = vmatpush.bf16.msra.mxu0 %v2422
    %2921 = vmatpush.bf16.msra.mxu0 %v2415
    %2922 = vmatpush.bf16.msra.mxu0 %v2408
    %2923 = vmatpush.bf16.msra.mxu0 %v2401
    %2924 = vmatpush.bf16.msra.mxu0 %v2394
    %2925 = vmatmul.bf16.gmra.mxu0 %v1245
    %v2926 = vpop.f32.mrf.mxu0
    %v2927 = vadd.f32 %v2914, %v2926
    %v2928 = vpop.f32.mrf.mxu0
    %2929 = vdwg.mxu0
    %2930 = vmatpush.bf16.msra.mxu0 %v2276
    %2931 = vmatpush.bf16.msra.mxu0 %v2269
    %2932 = vmatpush.bf16.msra.mxu0 %v2262
    %2933 = vmatpush.bf16.msra.mxu0 %v2255
    %2934 = vmatpush.bf16.msra.mxu0 %v2248
    %2935 = vmatpush.bf16.msra.mxu0 %v2241
    %2936 = vmatpush.bf16.msra.mxu0 %v2234
    %2937 = vmatpush.bf16.msra.mxu0 %v2227
    %2938 = vmatmul.bf16.gmra.mxu0 %v1242
    %v2939 = vpop.f32.mrf.mxu0
    %v2940 = vadd.f32 %v1509, %v2939
    %v2941 = vpop.f32.mrf.mxu0
    %2942 = vdwg.mxu0
    %2943 = vmatpush.bf16.msra.mxu0 %v2332
    %2944 = vmatpush.bf16.msra.mxu0 %v2325
    %2945 = vmatpush.bf16.msra.mxu0 %v2318
    %2946 = vmatpush.bf16.msra.mxu0 %v2311
    %2947 = vmatpush.bf16.msra.mxu0 %v2304
    %2948 = vmatpush.bf16.msra.mxu0 %v2297
    %2949 = vmatpush.bf16.msra.mxu0 %v2290
    %2950 = vmatpush.bf16.msra.mxu0 %v2283
    %2951 = vmatmul.bf16.gmra.mxu0 %v1243
    %v2952 = vpop.f32.mrf.mxu0
    %v2953 = vadd.f32 %v2940, %v2952
    %v2954 = vpop.f32.mrf.mxu0
    %2955 = vdwg.mxu0
    %2956 = vmatpush.bf16.msra.mxu0 %v2388
    %2957 = vmatpush.bf16.msra.mxu0 %v2381
    %2958 = vmatpush.bf16.msra.mxu0 %v2374
    %2959 = vmatpush.bf16.msra.mxu0 %v2367
    %2960 = vmatpush.bf16.msra.mxu0 %v2360
    %2961 = vmatpush.bf16.msra.mxu0 %v2353
    %2962 = vmatpush.bf16.msra.mxu0 %v2346
    %2963 = vmatpush.bf16.msra.mxu0 %v2339
    %2964 = vmatmul.bf16.gmra.mxu0 %v1244
    %v2965 = vpop.f32.mrf.mxu0
    %v2966 = vadd.f32 %v2953, %v2965
    %v2967 = vpop.f32.mrf.mxu0
    %2968 = vdwg.mxu0
    %2969 = vmatpush.bf16.msra.mxu0 %v2444
    %2970 = vmatpush.bf16.msra.mxu0 %v2437
    %2971 = vmatpush.bf16.msra.mxu0 %v2430
    %2972 = vmatpush.bf16.msra.mxu0 %v2423
    %2973 = vmatpush.bf16.msra.mxu0 %v2416
    %2974 = vmatpush.bf16.msra.mxu0 %v2409
    %2975 = vmatpush.bf16.msra.mxu0 %v2402
    %2976 = vmatpush.bf16.msra.mxu0 %v2395
    %2977 = vmatmul.bf16.gmra.mxu0 %v1245
    %v2978 = vpop.f32.mrf.mxu0
    %v2979 = vadd.f32 %v2966, %v2978
    %v2980 = vpop.f32.mrf.mxu0
    %2981 = vdwg.mxu0
    %2982 = vmatpush.bf16.msra.mxu0 %v2277
    %2983 = vmatpush.bf16.msra.mxu0 %v2270
    %2984 = vmatpush.bf16.msra.mxu0 %v2263
    %2985 = vmatpush.bf16.msra.mxu0 %v2256
    %2986 = vmatpush.bf16.msra.mxu0 %v2249
    %2987 = vmatpush.bf16.msra.mxu0 %v2242
    %2988 = vmatpush.bf16.msra.mxu0 %v2235
    %2989 = vmatpush.bf16.msra.mxu0 %v2228
    %2990 = vmatmul.bf16.gmra.mxu0 %v1242
    %v2991 = vpop.f32.mrf.mxu0
    %v2992 = vadd.f32 %v1510, %v2991
    %v2993 = vpop.f32.mrf.mxu0
    %2994 = vdwg.mxu0
    %2995 = vmatpush.bf16.msra.mxu0 %v2333
    %2996 = vmatpush.bf16.msra.mxu0 %v2326
    %2997 = vmatpush.bf16.msra.mxu0 %v2319
    %2998 = vmatpush.bf16.msra.mxu0 %v2312
    %2999 = vmatpush.bf16.msra.mxu0 %v2305
    %3000 = vmatpush.bf16.msra.mxu0 %v2298
    %3001 = vmatpush.bf16.msra.mxu0 %v2291
    %3002 = vmatpush.bf16.msra.mxu0 %v2284
    %3003 = vmatmul.bf16.gmra.mxu0 %v1243
    %v3004 = vpop.f32.mrf.mxu0
    %v3005 = vadd.f32 %v2992, %v3004
    %v3006 = vpop.f32.mrf.mxu0
    %3007 = vdwg.mxu0
    %3008 = vmatpush.bf16.msra.mxu0 %v2389
    %3009 = vmatpush.bf16.msra.mxu0 %v2382
    %3010 = vmatpush.bf16.msra.mxu0 %v2375
    %3011 = vmatpush.bf16.msra.mxu0 %v2368
    %3012 = vmatpush.bf16.msra.mxu0 %v2361
    %3013 = vmatpush.bf16.msra.mxu0 %v2354
    %3014 = vmatpush.bf16.msra.mxu0 %v2347
    %3015 = vmatpush.bf16.msra.mxu0 %v2340
    %3016 = vmatmul.bf16.gmra.mxu0 %v1244
    %v3017 = vpop.f32.mrf.mxu0
    %v3018 = vadd.f32 %v3005, %v3017
    %v3019 = vpop.f32.mrf.mxu0
    %3020 = vdwg.mxu0
    %3021 = vmatpush.bf16.msra.mxu0 %v2445
    %3022 = vmatpush.bf16.msra.mxu0 %v2438
    %3023 = vmatpush.bf16.msra.mxu0 %v2431
    %3024 = vmatpush.bf16.msra.mxu0 %v2424
    %3025 = vmatpush.bf16.msra.mxu0 %v2417
    %3026 = vmatpush.bf16.msra.mxu0 %v2410
    %3027 = vmatpush.bf16.msra.mxu0 %v2403
    %3028 = vmatpush.bf16.msra.mxu0 %v2396
    %3029 = vmatmul.bf16.gmra.mxu0 %v1245
    %v3030 = vpop.f32.mrf.mxu0
    %v3031 = vadd.f32 %v3018, %v3030
    %v3032 = vpop.f32.mrf.mxu0
    %3033 = vdwg.mxu0
    %3034 = vst [vmem:[#allocation14] sm:$0xff] %v2719
    %3035 = vst [vmem:[#allocation14 + $0x8] sm:$0xff] %v2771
    %3036 = vst [vmem:[#allocation14 + $0x10] sm:$0xff] %v2823
    %3037 = vst [vmem:[#allocation14 + $0x18] sm:$0xff] %v2875
    %3038 = vst [vmem:[#allocation14 + $0x20] sm:$0xff] %v2927
    %3039 = vst [vmem:[#allocation14 + $0x28] sm:$0xff] %v2979
    %3040 = vst [vmem:[#allocation14 + $0x30] sm:$0xff] %v3031
    // Predicated region
    $region58: #{tpu_custom_call.1} parent=1 // pred_check
      _
    $region59: #{tpu_custom_call.1} parent=1 // pred_check_branch
      %3042 = sbr.rel (0) target = $region61
    $region60: #{tpu_custom_call.1} parent=1 // pred_region
      %3044 = vsyncadd [#allocation4], 0
      %s3046 = sshll.u32 [#allocation14], 4
      %s3047 = int_to_ptr.vmem [resolvable:$true] %s3046
      %s3048 = sshll.u32 %s7, 4
      %s3049 = int_to_ptr.hbm [resolvable:$true] %s3048
      %3051 = dma.vmem_to_hbm [thread:$0]  %s3047, 896, %s3049, [#allocation4]
    $region61: #{tpu_custom_call.1} parent=1 // pred_fallthru
      _
    // Predicated region
    $region62: #{tpu_custom_call.1} parent=1 // pred_check
      _
    $region63: #{tpu_custom_call.1} parent=1 // pred_check_branch
      %3053 = sbr.rel (0) target = $region65
    $region64: #{tpu_custom_call.1} parent=1 // pred_region
      %3055 = dma.done [#allocation4], 896
    $region65: #{tpu_custom_call.1} parent=1 // pred_fallthru
      _
    %3056 = vsyncpa [#allocation3], 1
    %3057 = vsyncpa [#allocation6], 1
    %3058 = vsyncpa [#allocation9], 1
    %3059 = vsyncpa [#allocation12], 1
    %3060 = vsyncpa [#allocation4], 1

</llo_original>
